<compile_context>
chip_gen: v7x
topology: tpu7x:2x2x1
jax: 0.10.0
libtpu: 0.0.40
codegen_flags: <defaults>
</compile_context>

<pallas_src>
import functools
import math

import jax
import jax.numpy as jnp
from jax.experimental import pallas as pl
from jax.experimental.pallas import tpu as pltpu


# ----------------------------------------------------------------------------
# Small helpers
# ----------------------------------------------------------------------------
def _vmem_capacity_bytes():
    """Per-generation VMEM capacity (v5e/v6e: 128 MiB, v7x: 64 MiB), safe fallback."""
    try:
        return int(getattr(pltpu.get_tpu_info(), "vmem_capacity_bytes", 64 << 20))
    except Exception:
        return 64 << 20


def _largest_divisor(n, ok):
    for d in range(n, 0, -1):
        if n % d == 0 and ok(d):
            return d
    return n


def _stable_softplus(x):
    # log(1 + exp(x)) without overflow for large x (matches torch.log(1+exp(x))).
    return jnp.maximum(x, 0.0) + jnp.log1p(jnp.exp(-jnp.abs(x)))


# ----------------------------------------------------------------------------
# Kernel 1: fused reparameterized sampling (weights + bias column) + KL reduction.
#   wb  = mu + softplus(rho) * eps            (emitted in bf16 for the MXU)
#   kl += sum( log(prior_sigma/sigma) + (sigma^2 + (mu-prior_mu)^2)
#              / (2*prior_sigma^2) - 0.5 )    (f32, accumulated across row tiles)
# ----------------------------------------------------------------------------
def _reparam_kl_kernel(mu_ref, rho_ref, eps_ref, w_ref, kl_ref,
                       *, prior_mu, prior_sigma):
    @pl.when(pl.program_id(0) == 0)
    def _init():
        kl_ref[...] = jnp.zeros_like(kl_ref)

    mu = mu_ref[...]
    rho = rho_ref[...]
    sigma = _stable_softplus(rho)
    w_ref[...] = (mu + sigma * eps_ref[...]).astype(w_ref.dtype)

    kl = (jnp.log(prior_sigma / sigma)
          + (sigma * sigma + (mu - prior_mu) ** 2) / (2.0 * prior_sigma ** 2)
          - 0.5)
    kl_ref[...] += jnp.sum(kl, keepdims=True)          # resident (1,1) accumulator


def reparam_and_kl(mu2d, rho2d, eps2d, *, out_dtype, prior_mu, prior_sigma,
                   vmem_budget, vmem_limit):
    """mu2d/rho2d/eps2d: (R, C). Returns (sampled params (R,C) out_dtype, kl (1,1) f32)."""
    R, C = mu2d.shape
    # ~14 live bytes/element (3 f32 inputs + bf16 output), x2 for double-buffering.
    tr = _largest_divisor(
        R, lambda d: (d == R or d % 8 == 0) and d * C * 14 * 2 <= vmem_budget)
    kernel = functools.partial(_reparam_kl_kernel,
                               prior_mu=prior_mu, prior_sigma=prior_sigma)
    w, kl = pl.pallas_call(
        kernel,
        grid=(R // tr,),
        in_specs=[pl.BlockSpec((tr, C), lambda i: (i, 0)) for _ in range(3)],
        out_specs=(pl.BlockSpec((tr, C), lambda i: (i, 0)),
                   pl.BlockSpec((1, 1), lambda i: (0, 0))),
        out_shape=(jax.ShapeDtypeStruct((R, C), out_dtype),
                   jax.ShapeDtypeStruct((1, 1), jnp.float32)),
        compiler_params=pltpu.CompilerParams(
            dimension_semantics=("arbitrary",),        # KL accumulates across this axis
            vmem_limit_bytes=vmem_limit),
    )(mu2d, rho2d, eps2d)
    return w, kl


# ----------------------------------------------------------------------------
# Kernel 2: direct convolution (no HBM im2col), NCHW in -> NCHW out.
#   x_ref    : (1, Cin, H, W)      un-padded f32 activations (one sample)
#   wb_ref   : (Cout, K*K*Cin[+1]) sampled weights (+ bias column), bf16
#   o_ref    : (1, Cout, TH*Wo)    f32 output tile (NCHW, spatial flattened -> lanes)
#   xpad_ref : (Cin, Hp, Wp)       f32 VMEM scratch holding the zero-padded sample
# One MXU contraction per tile: (Cout, K*K*Cin) x (K*K*Cin, TH*Wo) with f32 acc,
# bias fused into the epilogue.
# ----------------------------------------------------------------------------
def _conv_kernel(x_ref, wb_ref, o_ref, xpad_ref,
                 *, K, stride, P, TH, Wo, KKC, has_bias):
    Cin, H, W = x_ref.shape[1], x_ref.shape[2], x_ref.shape[3]
    Cout = o_ref.shape[1]

    # Build the zero-padded sample in VMEM once per sample (first h-tile). The
    # wrapper no longer does pad/cast HBM passes; the h grid axis is "arbitrary"
    # so each core sees h==0 first for every sample it owns.
    @pl.when(pl.program_id(1) == 0)
    def _fill():
        xpad_ref[...] = jnp.zeros_like(xpad_ref)
        xpad_ref[:, P:P + H, P:P + W] = x_ref[0].astype(xpad_ref.dtype)

    r0 = pl.multiple_of(pl.program_id(1) * TH, TH)

    # One (K*K*Cin, TH*Wo) patch operand assembled in VMEM/registers.
    wins = []
    for di in range(K):
        for dj in range(K):
            if stride == 1:
                win = xpad_ref[:, pl.ds(r0 + di, TH), dj:dj + Wo]
            else:
                # TODO(synk): pre-split into stride^2 spatial phases for perf; this
                # strided value slice is correct but relayout-heavy.
                band = xpad_ref[:, pl.ds(r0 * stride + di, (TH - 1) * stride + 1), :]
                win = band[:, ::stride, dj:dj + (Wo - 1) * stride + 1:stride]
            wins.append(win.reshape(Cin, TH * Wo))
    patches = jnp.concatenate(wins, axis=0).astype(jnp.bfloat16)     # (KKC, TH*Wo)

    w = wb_ref[:, 0:KKC]                                             # (Cout, KKC) bf16
    acc = jnp.dot(w, patches, preferred_element_type=jnp.float32)    # (Cout, TH*Wo) f32
    if has_bias:
        acc = acc + wb_ref[:, KKC:KKC + 1].astype(jnp.float32)       # fused bias add
    o_ref[...] = acc.reshape(1, Cout, TH * Wo).astype(o_ref.dtype)


def _choose_tile_h(Ho, Wo, Cin, Cout, H, W, Hp, Wp, C2, K, budget):
    """Largest output-row tile TH (divisor of Ho, lane-dense) fitting the VMEM budget."""
    fixed = (Cin * H * W * 4) * 2 + Cin * Hp * Wp * 4 + (Cout * C2 * 2) * 2

    def cost(th):
        m = th * Wo
        return fixed + (Cout * m * 4) * 2 + (K * K * Cin) * m * 6 + Cout * m * 4

    return _largest_divisor(
        Ho, lambda th: (th == Ho or (th * Wo) % 128 == 0) and cost(th) <= budget)


def conv2d_direct(x_nchw, wb, *, K, stride, padding, has_bias,
                  vmem_budget, vmem_limit):
    """x_nchw: (N,Cin,H,W) f32; wb: (Cout, K*K*Cin[+1]) bf16. Returns (N,Cout,Ho*Wo) f32."""
    N, Cin, H, W = x_nchw.shape
    Cout, C2 = wb.shape
    KKC = K * K * Cin
    Ho = (H + 2 * padding - K) // stride + 1
    Wo = (W + 2 * padding - K) // stride + 1
    Hp, Wp = H + 2 * padding, W + 2 * padding
    TH = _choose_tile_h(Ho, Wo, Cin, Cout, H, W, Hp, Wp, C2, K, vmem_budget)

    kernel = functools.partial(_conv_kernel, K=K, stride=stride, P=padding,
                               TH=TH, Wo=Wo, KKC=KKC, has_bias=has_bias)
    out = pl.pallas_call(
        kernel,
        out_shape=jax.ShapeDtypeStruct((N, Cout, Ho * Wo), jnp.float32),
        grid=(N, Ho // TH),
        in_specs=[
            pl.BlockSpec((1, Cin, H, W), lambda n, t: (n, 0, 0, 0)),   # resident over t
            pl.BlockSpec((Cout, C2), lambda n, t: (0, 0)),             # resident always
        ],
        out_specs=pl.BlockSpec((1, Cout, TH * Wo), lambda n, t: (n, 0, t)),
        scratch_shapes=[pltpu.VMEM((Cin, Hp, Wp), jnp.float32)],
        compiler_params=pltpu.CompilerParams(
            # "parallel" on the batch axis only pays on multi-TC chips (v7x); it is a
            # harmless no-op on v5e/v6e. The h axis must stay "arbitrary" (scratch fill
            # at h==0 + resident input block).
            dimension_semantics=("parallel", "arbitrary"),
            vmem_limit_bytes=vmem_limit),
    )(x_nchw, wb)
    return out


# ----------------------------------------------------------------------------
# BayesianConv2d forward (returns (output NCHW f32, kl_divergence scalar))
# ----------------------------------------------------------------------------
def bayesian_conv2d_forward(params, x_nchw, key, *, stride=1, padding=0,
                            prior_mu=0.0, prior_sigma=0.1):
    weight_mu = params["weight_mu"]                        # (Cout, Cin, K, K)
    weight_rho = params["weight_rho"]
    Cout, Cin, K, _ = weight_mu.shape
    has_bias = params.get("bias_mu") is not None
    KKC = K * K * Cin

    # Pack weights to the GEMM layout (Cout, K*K*Cin): column = (di*K+dj)*Cin + c,
    # matching the in-kernel patch row order. Bias (if any) becomes an extra column
    # so ONE reparam/KL kernel samples everything.
    def pack_w(w):
        return jnp.transpose(w, (0, 2, 3, 1)).reshape(Cout, KKC)

    mu_p, rho_p = pack_w(weight_mu), pack_w(weight_rho)
    if has_bias:
        mu_p = jnp.concatenate([mu_p, params["bias_mu"].reshape(Cout, 1)], axis=1)
        rho_p = jnp.concatenate([rho_p, params["bias_rho"].reshape(Cout, 1)], axis=1)

    # TODO(synk): draw eps in-kernel (pltpu.prng_seed + prng_random_bits) to save one
    # HBM-sized input; kept host-side for exact, deterministic jax.random semantics.
    eps = jax.random.normal(key, mu_p.shape, jnp.float32)

    cap = _vmem_capacity_bytes()
    vmem_budget = cap // 2
    vmem_limit = int(cap * 3 // 4)

    wb, kl = reparam_and_kl(mu_p, rho_p, eps, out_dtype=jnp.bfloat16,
                            prior_mu=prior_mu, prior_sigma=prior_sigma,
                            vmem_budget=vmem_budget, vmem_limit=vmem_limit)

    out_flat = conv2d_direct(x_nchw, wb, K=K, stride=stride, padding=padding,
                             has_bias=has_bias,
                             vmem_budget=vmem_budget, vmem_limit=vmem_limit)

    N, _, H, W = x_nchw.shape
    Ho = (H + 2 * padding - K) // stride + 1
    Wo = (W + 2 * padding - K) // stride + 1
    out = out_flat.reshape(N, Cout, Ho, Wo)                # free (row-major) reshape
    return out, kl[0, 0]


# ----------------------------------------------------------------------------
# Deterministic parameter init matching the PyTorch _reset_parameters()
# (kaiming_uniform a=sqrt(5) -> U(-1/sqrt(fan_in), 1/sqrt(fan_in)); rho = -3)
# ----------------------------------------------------------------------------
def init_params(key, in_channels, out_channels, kernel_size, bias=True):
    kw, kb = jax.random.split(key)
    fan_in = in_channels * kernel_size * kernel_size
    bound = 1.0 / math.sqrt(fan_in)
    params = {
        "weight_mu": jax.random.uniform(
            kw, (out_channels, in_channels, kernel_size, kernel_size),
            jnp.float32, -bound, bound),
        "weight_rho": jnp.full(
            (out_channels, in_channels, kernel_size, kernel_size), -3.0, jnp.float32),
    }
    if bias:
        params["bias_mu"] = jax.random.uniform(
            kb, (out_channels,), jnp.float32, -bound, bound)
        params["bias_rho"] = jnp.full((out_channels,), -3.0, jnp.float32)
    else:
        params["bias_mu"] = None
        params["bias_rho"] = None
    return params


if __name__ == "__main__":
    key = jax.random.PRNGKey(0)
    pkey, xkey, skey = jax.random.split(key, 3)

    in_ch, out_ch, ksz, pad = 4, 8, 3, 1
    params = init_params(pkey, in_ch, out_ch, ksz, bias=True)
    x = jax.random.normal(xkey, (2, in_ch, 16, 16), jnp.float32)   # NCHW like PyTorch

    fwd = jax.jit(functools.partial(bayesian_conv2d_forward, stride=1, padding=pad))
    out, kl = fwd(params, x, skey)
    jax.block_until_ready((out, kl))

    assert out.shape == (2, out_ch, 16, 16) and out.dtype == jnp.float32
    assert kl.shape == () and bool(jnp.isfinite(kl))

    # ---- correctness cross-check vs. plain XLA with the same sampled params ----
    KKC = ksz * ksz * in_ch
    eps = jax.random.normal(skey, (out_ch, KKC + 1), jnp.float32)   # same draw as fwd
    w_mu_p = jnp.transpose(params["weight_mu"], (0, 2, 3, 1)).reshape(out_ch, KKC)
    w_rho_p = jnp.transpose(params["weight_rho"], (0, 2, 3, 1)).reshape(out_ch, KKC)
    mu_c = jnp.concatenate([w_mu_p, params["bias_mu"].reshape(out_ch, 1)], axis=1)
    rho_c = jnp.concatenate([w_rho_p, params["bias_rho"].reshape(out_ch, 1)], axis=1)
    sig_c = _stable_softplus(rho_c)
    wb_ref = (mu_c + sig_c * eps).astype(jnp.bfloat16).astype(jnp.float32)
    w_ref = wb_ref[:, :KKC].reshape(out_ch, ksz, ksz, in_ch).transpose(0, 3, 1, 2)
    b_ref = wb_ref[:, KKC]
    xq = jnp.pad(x, ((0, 0), (0, 0), (pad, pad), (pad, pad)))
    xq = xq.astype(jnp.bfloat16).astype(jnp.float32)
    ref = jax.lax.conv_general_dilated(
        xq, w_ref, (1, 1), "VALID", dimension_numbers=("NCHW", "OIHW", "NCHW"),
        precision=jax.lax.Precision.HIGHEST) + b_ref[None, :, None, None]
    kl_ref = jnp.sum(jnp.log(0.1 / sig_c) + (sig_c ** 2 + mu_c ** 2) / (2 * 0.1 ** 2) - 0.5)
    assert bool(jnp.allclose(out, ref, atol=5e-2, rtol=5e-2)), \
        float(jnp.max(jnp.abs(out - ref)))
    assert bool(jnp.allclose(kl, kl_ref, rtol=1e-3, atol=5e-2)), (float(kl), float(kl_ref))

    print("KERNEL_OK")
</pallas_src>

<mosaic_0001>
module attributes {stable_mosaic.version = 11 : i64} {
  func.func @_conv_kernel(%arg0: i32, %arg1: i32, %arg2: memref<1x4x16x16xf32, #tpu.memory_space<vmem>>, %arg3: memref<8x37xbf16, #tpu.memory_space<vmem>>, %arg4: memref<1x8x256xf32, #tpu.memory_space<vmem>>, %arg5: memref<4x18x18xf32, #tpu.memory_space<vmem>>) attributes {dimension_semantics = [#tpu.dimension_semantics<parallel>, #tpu.dimension_semantics<arbitrary>], iteration_bounds = array<i64: 2, 1>, scalar_prefetch = 0 : i64, scratch_operands = 1 : i64, tpu.core_type = #tpu.core_type<tc>, window_params = [{transform_indices = @transform_0, window_bounds = array<i64: 1, 4, 16, 16>}, {pipeline_mode = #tpu.pipeline_mode<synchronous>, transform_indices = @transform_1, window_bounds = array<i64: 8, 37>}, {transform_indices = @transform_2, window_bounds = array<i64: 1, 8, 256>}]} {
    %c0_i32 = arith.constant 0 : i32
    %0 = arith.cmpi eq, %arg1, %c0_i32 : i32
    %1 = arith.extui %0 : i1 to i32
    %c0_i32_0 = arith.constant 0 : i32
    %2 = arith.cmpi ne, %1, %c0_i32_0 : i32
    scf.if %2 {
      %cst_29 = arith.constant 0.000000e+00 : f32
      %51 = vector.broadcast %cst_29 : f32 to vector<4x18x18xf32>
      %c0_30 = arith.constant 0 : index
      %c0_31 = arith.constant 0 : index
      %c0_32 = arith.constant 0 : index
      %52 = vector.load %arg5[%c0_30, %c0_31, %c0_32] : memref<4x18x18xf32, #tpu.memory_space<vmem>>, vector<4x18x18xf32>
      tpu.vector_store %arg5[%c0_30, %c0_31, %c0_32], %51 {strides = array<i32>} : memref<4x18x18xf32, #tpu.memory_space<vmem>>, vector<4x18x18xf32>,
      %c0_33 = arith.constant 0 : index
      %c0_34 = arith.constant 0 : index
      %c0_35 = arith.constant 0 : index
      %c0_36 = arith.constant 0 : index
      %53 = vector.load %arg2[%c0_33, %c0_34, %c0_35, %c0_36] : memref<1x4x16x16xf32, #tpu.memory_space<vmem>>, vector<1x4x16x16xf32>
      %54 = vector.shape_cast %53 : vector<1x4x16x16xf32> to vector<4x16x16xf32>
      %c0_37 = arith.constant 0 : index
      %c1_38 = arith.constant 1 : index
      %c1_39 = arith.constant 1 : index
      %55 = vector.load %arg5[%c0_37, %c1_38, %c1_39] : memref<4x18x18xf32, #tpu.memory_space<vmem>>, vector<4x16x16xf32>
      tpu.vector_store %arg5[%c0_37, %c1_38, %c1_39], %54 {strides = array<i32>} : memref<4x18x18xf32, #tpu.memory_space<vmem>>, vector<4x16x16xf32>,
    } else {
    }
    %c16_i32 = arith.constant 16 : i32
    %3 = arith.muli %arg1, %c16_i32 : i32
    %4 = tpu.assume_multiple %3, 16 : i32
    %c0_i32_1 = arith.constant 0 : i32
    %5 = arith.addi %4, %c0_i32_1 : i32
    %c0 = arith.constant 0 : index
    %6 = arith.index_cast %5 : i32 to index
    %c0_2 = arith.constant 0 : index
    %7 = vector.load %arg5[%c0, %6, %c0_2] : memref<4x18x18xf32, #tpu.memory_space<vmem>>, vector<4x16x16xf32>
    %8 = vector.shape_cast %7 : vector<4x16x16xf32> to vector<4x256xf32>
    %c0_i32_3 = arith.constant 0 : i32
    %9 = arith.addi %4, %c0_i32_3 : i32
    %c0_4 = arith.constant 0 : index
    %10 = arith.index_cast %9 : i32 to index
    %c1 = arith.constant 1 : index
    %11 = vector.load %arg5[%c0_4, %10, %c1] : memref<4x18x18xf32, #tpu.memory_space<vmem>>, vector<4x16x16xf32>
    %12 = vector.shape_cast %11 : vector<4x16x16xf32> to vector<4x256xf32>
    %c0_i32_5 = arith.constant 0 : i32
    %13 = arith.addi %4, %c0_i32_5 : i32
    %c0_6 = arith.constant 0 : index
    %14 = arith.index_cast %13 : i32 to index
    %c2 = arith.constant 2 : index
    %15 = vector.load %arg5[%c0_6, %14, %c2] : memref<4x18x18xf32, #tpu.memory_space<vmem>>, vector<4x16x16xf32>
    %16 = vector.shape_cast %15 : vector<4x16x16xf32> to vector<4x256xf32>
    %c1_i32 = arith.constant 1 : i32
    %17 = arith.addi %4, %c1_i32 : i32
    %c0_7 = arith.constant 0 : index
    %18 = arith.index_cast %17 : i32 to index
    %c0_8 = arith.constant 0 : index
    %19 = vector.load %arg5[%c0_7, %18, %c0_8] : memref<4x18x18xf32, #tpu.memory_space<vmem>>, vector<4x16x16xf32>
    %20 = vector.shape_cast %19 : vector<4x16x16xf32> to vector<4x256xf32>
    %c1_i32_9 = arith.constant 1 : i32
    %21 = arith.addi %4, %c1_i32_9 : i32
    %c0_10 = arith.constant 0 : index
    %22 = arith.index_cast %21 : i32 to index
    %c1_11 = arith.constant 1 : index
    %23 = vector.load %arg5[%c0_10, %22, %c1_11] : memref<4x18x18xf32, #tpu.memory_space<vmem>>, vector<4x16x16xf32>
    %24 = vector.shape_cast %23 : vector<4x16x16xf32> to vector<4x256xf32>
    %c1_i32_12 = arith.constant 1 : i32
    %25 = arith.addi %4, %c1_i32_12 : i32
    %c0_13 = arith.constant 0 : index
    %26 = arith.index_cast %25 : i32 to index
    %c2_14 = arith.constant 2 : index
    %27 = vector.load %arg5[%c0_13, %26, %c2_14] : memref<4x18x18xf32, #tpu.memory_space<vmem>>, vector<4x16x16xf32>
    %28 = vector.shape_cast %27 : vector<4x16x16xf32> to vector<4x256xf32>
    %c2_i32 = arith.constant 2 : i32
    %29 = arith.addi %4, %c2_i32 : i32
    %c0_15 = arith.constant 0 : index
    %30 = arith.index_cast %29 : i32 to index
    %c0_16 = arith.constant 0 : index
    %31 = vector.load %arg5[%c0_15, %30, %c0_16] : memref<4x18x18xf32, #tpu.memory_space<vmem>>, vector<4x16x16xf32>
    %32 = vector.shape_cast %31 : vector<4x16x16xf32> to vector<4x256xf32>
    %c2_i32_17 = arith.constant 2 : i32
    %33 = arith.addi %4, %c2_i32_17 : i32
    %c0_18 = arith.constant 0 : index
    %34 = arith.index_cast %33 : i32 to index
    %c1_19 = arith.constant 1 : index
    %35 = vector.load %arg5[%c0_18, %34, %c1_19] : memref<4x18x18xf32, #tpu.memory_space<vmem>>, vector<4x16x16xf32>
    %36 = vector.shape_cast %35 : vector<4x16x16xf32> to vector<4x256xf32>
    %c2_i32_20 = arith.constant 2 : i32
    %37 = arith.addi %4, %c2_i32_20 : i32
    %c0_21 = arith.constant 0 : index
    %38 = arith.index_cast %37 : i32 to index
    %c2_22 = arith.constant 2 : index
    %39 = vector.load %arg5[%c0_21, %38, %c2_22] : memref<4x18x18xf32, #tpu.memory_space<vmem>>, vector<4x16x16xf32>
    %40 = vector.shape_cast %39 : vector<4x16x16xf32> to vector<4x256xf32>
    %41 = tpu.concatenate %8, %12, %16, %20, %24, %28, %32, %36, %40 in 0 : vector<4x256xf32>, vector<4x256xf32>, vector<4x256xf32>, vector<4x256xf32>, vector<4x256xf32>, vector<4x256xf32>, vector<4x256xf32>, vector<4x256xf32>, vector<4x256xf32> -> vector<36x256xf32>
    %42 = arith.truncf %41 : vector<36x256xf32> to vector<36x256xbf16>
    %c0_23 = arith.constant 0 : index
    %c0_24 = arith.constant 0 : index
    %43 = vector.load %arg3[%c0_23, %c0_24] : memref<8x37xbf16, #tpu.memory_space<vmem>>, vector<8x36xbf16>
    %cst = arith.constant dense<0.000000e+00> : vector<8x256xf32>
    %44 = tpu.matmul %43, %42, %cst {dimension_numbers = #tpu.dot_dimension_numbers<[1], [0], [0], [1], [0, 0, 1, 1], [], []>} : vector<8x36xbf16>, vector<36x256xbf16>, vector<8x256xf32> -> vector<8x256xf32>
    %c0_25 = arith.constant 0 : index
    %c36 = arith.constant 36 : index
    %45 = vector.load %arg3[%c0_25, %c36] : memref<8x37xbf16, #tpu.memory_space<vmem>>, vector<8x1xbf16>
    %46 = arith.extf %45 : vector<8x1xbf16> to vector<8x1xf32>
    %47 = vector.broadcast %46 : vector<8x1xf32> to vector<8x256xf32>
    %48 = arith.addf %44, %47 : vector<8x256xf32>
    %49 = vector.shape_cast %48 : vector<8x256xf32> to vector<1x8x256xf32>
    %c0_26 = arith.constant 0 : index
    %c0_27 = arith.constant 0 : index
    %c0_28 = arith.constant 0 : index
    %50 = vector.load %arg4[%c0_26, %c0_27, %c0_28] : memref<1x8x256xf32, #tpu.memory_space<vmem>>, vector<1x8x256xf32>
    tpu.vector_store %arg4[%c0_26, %c0_27, %c0_28], %49 {strides = array<i32>} : memref<1x8x256xf32, #tpu.memory_space<vmem>>, vector<1x8x256xf32>,
    return
  }
  func.func @transform_0(%arg0: i32, %arg1: i32) -> (i32, i32, i32, i32) {
    %c0_i32 = arith.constant 0 : i32
    %c0_i32_0 = arith.constant 0 : i32
    %c0_i32_1 = arith.constant 0 : i32
    %c0_i32_2 = arith.constant 0 : i32
    return %arg0, %c0_i32, %c0_i32_0, %c0_i32_1 : i32, i32, i32, i32
  }
  func.func @transform_1(%arg0: i32, %arg1: i32) -> (i32, i32) {
    %c0_i32 = arith.constant 0 : i32
    %c0_i32_0 = arith.constant 0 : i32
    %c0_i32_1 = arith.constant 0 : i32
    return %c0_i32, %c0_i32_0 : i32, i32
  }
  func.func @transform_2(%arg0: i32, %arg1: i32) -> (i32, i32, i32) {
    %c0_i32 = arith.constant 0 : i32
    %c0_i32_0 = arith.constant 0 : i32
    return %arg0, %c0_i32, %arg1 : i32, i32, i32
  }
}

module attributes {stable_mosaic.version = 11 : i64} {
  func.func @_reparam_kl_kernel(%arg0: i32, %arg1: memref<8x37xf32, #tpu.memory_space<vmem>>, %arg2: memref<8x37xf32, #tpu.memory_space<vmem>>, %arg3: memref<8x37xf32, #tpu.memory_space<vmem>>, %arg4: memref<8x37xbf16, #tpu.memory_space<vmem>>, %arg5: memref<1x1xf32, #tpu.memory_space<vmem>>) attributes {dimension_semantics = [#tpu.dimension_semantics<arbitrary>], iteration_bounds = array<i64: 1>, scalar_prefetch = 0 : i64, scratch_operands = 0 : i64, tpu.core_type = #tpu.core_type<tc>, window_params = [{transform_indices = @transform_0, window_bounds = array<i64: 8, 37>}, {transform_indices = @transform_1, window_bounds = array<i64: 8, 37>}, {transform_indices = @transform_2, window_bounds = array<i64: 8, 37>}, {transform_indices = @transform_3, window_bounds = array<i64: 8, 37>}, {pipeline_mode = #tpu.pipeline_mode<synchronous>, transform_indices = @transform_4, window_bounds = array<i64: 1, 1>}]} {
    %c0_i32 = arith.constant 0 : i32
    %0 = arith.cmpi eq, %arg0, %c0_i32 : i32
    %1 = arith.extui %0 : i1 to i32
    %c0_i32_0 = arith.constant 0 : i32
    %2 = arith.cmpi ne, %1, %c0_i32_0 : i32
    scf.if %2 {
      %cst_18 = arith.constant 0.000000e+00 : f32
      %39 = vector.broadcast %cst_18 : f32 to vector<1x1xf32>
      %c0_19 = arith.constant 0 : index
      %c0_20 = arith.constant 0 : index
      %40 = vector.load %arg5[%c0_19, %c0_20] : memref<1x1xf32, #tpu.memory_space<vmem>>, vector<1x1xf32>
      tpu.vector_store %arg5[%c0_19, %c0_20], %39 {strides = array<i32>} : memref<1x1xf32, #tpu.memory_space<vmem>>, vector<1x1xf32>,
    } else {
    }
    %c0 = arith.constant 0 : index
    %c0_1 = arith.constant 0 : index
    %3 = vector.load %arg1[%c0, %c0_1] : memref<8x37xf32, #tpu.memory_space<vmem>>, vector<8x37xf32>
    %c0_2 = arith.constant 0 : index
    %c0_3 = arith.constant 0 : index
    %4 = vector.load %arg2[%c0_2, %c0_3] : memref<8x37xf32, #tpu.memory_space<vmem>>, vector<8x37xf32>
    %cst = arith.constant 0.000000e+00 : f32
    %5 = vector.broadcast %cst : f32 to vector<8x37xf32>
    %6 = arith.maximumf %4, %5 : vector<8x37xf32>
    %7 = math.absf %4 : vector<8x37xf32>
    %cst_4 = arith.constant 0.000000e+00 : f32
    %8 = vector.broadcast %cst_4 : f32 to vector<8x37xf32>
    %9 = arith.subf %8, %7 : vector<8x37xf32>
    %10 = math.exp %9 : vector<8x37xf32>
    %11 = math.log1p %10 : vector<8x37xf32>
    %12 = arith.addf %6, %11 : vector<8x37xf32>
    %c0_5 = arith.constant 0 : index
    %c0_6 = arith.constant 0 : index
    %13 = vector.load %arg3[%c0_5, %c0_6] : memref<8x37xf32, #tpu.memory_space<vmem>>, vector<8x37xf32>
    %14 = arith.mulf %12, %13 : vector<8x37xf32>
    %15 = arith.addf %3, %14 : vector<8x37xf32>
    %16 = arith.truncf %15 : vector<8x37xf32> to vector<8x37xbf16>
    %c0_7 = arith.constant 0 : index
    %c0_8 = arith.constant 0 : index
    %17 = vector.load %arg4[%c0_7, %c0_8] : memref<8x37xbf16, #tpu.memory_space<vmem>>, vector<8x37xbf16>
    tpu.vector_store %arg4[%c0_7, %c0_8], %16 {strides = array<i32>} : memref<8x37xbf16, #tpu.memory_space<vmem>>, vector<8x37xbf16>,
    %cst_9 = arith.constant 1.000000e-01 : f32
    %18 = vector.broadcast %cst_9 : f32 to vector<8x37xf32>
    %19 = arith.divf %18, %12 : vector<8x37xf32>
    %20 = math.log %19 : vector<8x37xf32>
    %21 = arith.mulf %12, %12 : vector<8x37xf32>
    %cst_10 = arith.constant 0.000000e+00 : f32
    %22 = vector.broadcast %cst_10 : f32 to vector<8x37xf32>
    %23 = arith.subf %3, %22 : vector<8x37xf32>
    %24 = arith.mulf %23, %23 : vector<8x37xf32>
    %25 = arith.addf %21, %24 : vector<8x37xf32>
    %cst_11 = arith.constant 2.000000e-02 : f32
    %26 = vector.broadcast %cst_11 : f32 to vector<8x37xf32>
    %27 = arith.divf %25, %26 : vector<8x37xf32>
    %28 = arith.addf %20, %27 : vector<8x37xf32>
    %cst_12 = arith.constant 5.000000e-01 : f32
    %29 = vector.broadcast %cst_12 : f32 to vector<8x37xf32>
    %30 = arith.subf %28, %29 : vector<8x37xf32>
    %c0_13 = arith.constant 0 : index
    %c0_14 = arith.constant 0 : index
    %31 = vector.load %arg5[%c0_13, %c0_14] : memref<1x1xf32, #tpu.memory_space<vmem>>, vector<1x1xf32>
    %32 = vector.shape_cast %30 : vector<8x37xf32> to vector<1x8x37xf32>
    %cst_15 = arith.constant dense<0.000000e+00> : vector<1xf32>
    %33 = vector.multi_reduction <add>, %32, %cst_15 [1, 2] : vector<1x8x37xf32> to vector<1xf32>
    %34 = vector.shape_cast %33 : vector<1xf32> to vector<1x1x1xf32>
    %35 = vector.extract %34[0, 0, 0] : f32 from vector<1x1x1xf32>
    %36 = vector.broadcast %35 : f32 to vector<1x1xf32>
    %37 = arith.addf %31, %36 : vector<1x1xf32>
    %c0_16 = arith.constant 0 : index
    %c0_17 = arith.constant 0 : index
    %38 = vector.load %arg5[%c0_16, %c0_17] : memref<1x1xf32, #tpu.memory_space<vmem>>, vector<1x1xf32>
    tpu.vector_store %arg5[%c0_16, %c0_17], %37 {strides = array<i32>} : memref<1x1xf32, #tpu.memory_space<vmem>>, vector<1x1xf32>,
    return
  }
  func.func @transform_0(%arg0: i32) -> (i32, i32) {
    %c0_i32 = arith.constant 0 : i32
    %c0_i32_0 = arith.constant 0 : i32
    return %arg0, %c0_i32 : i32, i32
  }
  func.func @transform_1(%arg0: i32) -> (i32, i32) {
    %c0_i32 = arith.constant 0 : i32
    %c0_i32_0 = arith.constant 0 : i32
    return %arg0, %c0_i32 : i32, i32
  }
  func.func @transform_2(%arg0: i32) -> (i32, i32) {
    %c0_i32 = arith.constant 0 : i32
    %c0_i32_0 = arith.constant 0 : i32
    return %arg0, %c0_i32 : i32, i32
  }
  func.func @transform_3(%arg0: i32) -> (i32, i32) {
    %c0_i32 = arith.constant 0 : i32
    %c0_i32_0 = arith.constant 0 : i32
    return %arg0, %c0_i32 : i32, i32
  }
  func.func @transform_4(%arg0: i32) -> (i32, i32) {
    %c0_i32 = arith.constant 0 : i32
    %c0_i32_0 = arith.constant 0 : i32
    %c0_i32_1 = arith.constant 0 : i32
    return %c0_i32, %c0_i32_0 : i32, i32
  }
}

</mosaic_0001>

<llo_original>
// kernel: bayesian_conv2d_forward.2
$region0: #{bayesian_conv2d_forward.2}
  #allocation0 [shape = 'u32[]', space=smem, size = 0x4, offset = 0x4, fixed_abs, tag = 'smem constant byte address 0x4 - core index']
  #allocation1 [shape = 'u32[144,128]{1,0:T(1,128)}', space=vmem, size = 0x12000, scoped, tag = 'internal scratch']
  %s0 = inlined_call_operand.vmem [shape: f32[8,37], index: 0, kind: input, shape index: {}]
  %s1 = inlined_call_operand.vmem [shape: f32[8,37], index: 1, kind: input, shape index: {}]
  %s2 = inlined_call_operand.vmem [shape: f32[8,37], index: 2, kind: input, shape index: {}]
  %s3 = inlined_call_operand.vmem [shape: bf16[8,37], index: 3, kind: output, shape index: {0}]
  %s4 = inlined_call_operand.hbm [shape: f32[1,1], index: 4, kind: output, shape index: {1}]
  %5 = xla_tuple %s3, %s4
  %s6 = sld [smem:[#allocation0]]
  $region34: #{bayesian_conv2d_forward.2} parent=0
    _
  %s8 = ssub.s32 1, %s6
  %s9 = scalar_select 0, %s8, %s6
  $region1: #{bayesian_conv2d_forward.2} parent=0
    #allocation2 [shape = 'u8[512]{0}', space=vmem, size = 0x400, scoped, tag = 'output window, operand 1, single buffered']
    #allocation3 [shape = 's32[1]{0}', space=sflag, size = 0x4, scoped, tag = 'scoped memory for bayesian_conv2d_forward.2']
    %10 = vsyncpa [#allocation3], 0
    // Predicated region
    $region2: #{bayesian_conv2d_forward.2} parent=1 // pred_check
      _
    $region3: #{bayesian_conv2d_forward.2} parent=1 // pred_check_branch
      %12 = sbr.rel (0) target = $region5
    $region4: #{bayesian_conv2d_forward.2} parent=1 // pred_region
      _
    $region5: #{bayesian_conv2d_forward.2} parent=1 // pred_fallthru
      _
    // Predicated region
    $region6: #{bayesian_conv2d_forward.2} parent=1 // pred_check
      _
    $region7: #{bayesian_conv2d_forward.2} parent=1 // pred_check_branch
      %14 = sbr.rel (0) target = $region9
    $region8: #{bayesian_conv2d_forward.2} parent=1 // pred_region
      _
    $region9: #{bayesian_conv2d_forward.2} parent=1 // pred_fallthru
      _
    // Predicated region
    $region10: #{bayesian_conv2d_forward.2} parent=1 // pred_check
      _
    $region11: #{bayesian_conv2d_forward.2} parent=1 // pred_check_branch
      %16 = sbr.rel (0) target = $region13
    $region12: #{bayesian_conv2d_forward.2} parent=1 // pred_region
      _
    $region13: #{bayesian_conv2d_forward.2} parent=1 // pred_fallthru
      _
    %p17 = scmp.eq.s32.totalorder 0, 0
    // Predicated region
    $region14: #{bayesian_conv2d_forward.2} parent=1 // pred_check
      %p18 = pneg %p17
    $region15: #{bayesian_conv2d_forward.2} parent=1 // pred_check_branch
      %20 = sbr.rel (%p18) target = $region17
    $region16: #{bayesian_conv2d_forward.2} parent=1 // pred_region
      %vm21 = vcmask 0
      %22 = vst.msk [vmem:[#allocation2] sm:$0x1] %vm21, 0.0
    $region17: #{bayesian_conv2d_forward.2} parent=1 // pred_fallthru
      _
    %v23 = vld [vmem:[%s0] sm:$0xff]
    %v24 = vld [vmem:[%s1] sm:$0xff]
    %v25 = vmax.f32 %v24, 0.0
    %v26 = vand.u32 2147483647, %v24
    %v27 = vsub.f32 0.0, %v26
    %v28 = vmul.f32 %v27, 1.442695
    %v29 = vpow.pop %v28
    %v30 = vadd.f32 %v29, 1.0
    %v31 = vlog2.pop %v30
    %v32 = vmul.f32 %v31, 0.6931472
    %v33 = vmul.f32 -0.5, %v29
    %v34 = vadd.f32 %v33, 1.0
    %v35 = vmul.f32 %v34, %v29
    %v36 = vand.u32 2147483647, %v29
    %vm37 = vcmp.lt.f32.partialorder %v36, 0.0004427343
    %v38 = vsel %vm37, %v35, %v32
    %v39 = vadd.f32 %v25, %v38
    %v40 = vld [vmem:[%s2] sm:$0xff]
    %v41 = vmul.f32 %v39, %v40
    %v42 = vadd.f32 %v23, %v41
    %v43 = vpack.c.bf16 %v42, %v42
    %vm44 = vcmask 297984
    %45 = vst.msk [vmem:[%s3] sm:$0xf] %vm44, %v43
    %v46 = vrcp.pop %v39
    %v47 = vmul.f32 0.1, %v46
    %v48 = vlog2.pop %v47
    %v49 = vmul.f32 %v48, 0.6931472
    %v50 = vmul.f32 %v39, %v39
    %v51 = vmul.f32 %v23, %v23
    %v52 = vadd.f32 %v50, %v51
    %v53 = vrcp.pop 0.02
    %v54 = vmul.f32 %v52, %v53
    %v55 = vadd.f32 %v49, %v54
    %v56 = vsub.f32 %v55, 0.5
    %v57 = vld [vmem:[#allocation2] sm:$0x1]
    %vm58 = vcmask 302080
    %v59 = vsel %vm58, %v56, 0.0
    %60 = vadd.xlane.f32.xlu0 %v59
    %v61 = vpop.xlane.xlu0 %60
    %v62 = vrot.slane %v61, 4
    %v63 = vadd.f32 %v61, %v62
    %v64 = vrot.slane %v63, 2
    %v65 = vadd.f32 %v63, %v64
    %v66 = vrot.slane %v65, 1
    %v67 = vadd.f32 %v65, %v66
    %s68 = vtos %v67
    %v69 = vstv %s68
    %v70 = vadd.f32 %v57, %v69
    %vm71 = vcmask 0
    %72 = vst.msk [vmem:[#allocation2] sm:$0x1] %vm71, %v70
    // Predicated region
    $region18: #{bayesian_conv2d_forward.2} parent=1 // pred_check
      _
    $region19: #{bayesian_conv2d_forward.2} parent=1 // pred_check_branch
      %74 = sbr.rel (0) target = $region21
    $region20: #{bayesian_conv2d_forward.2} parent=1 // pred_region
      _
    $region21: #{bayesian_conv2d_forward.2} parent=1 // pred_fallthru
      _
    // Predicated region
    $region22: #{bayesian_conv2d_forward.2} parent=1 // pred_check
      _
    $region23: #{bayesian_conv2d_forward.2} parent=1 // pred_check_branch
      %76 = sbr.rel (0) target = $region25
    $region24: #{bayesian_conv2d_forward.2} parent=1 // pred_region
      %s78 = ssub.s32 16, 16
      %79 = vsyncadd [#allocation3], %s78
      %s81 = sshll.u32 [#allocation2], 4
      %s82 = int_to_ptr.vmem [resolvable:$true] %s81
      %84 = dma.vmem_to_hbm [thread:$0]  %s82, 16, %s4, [#allocation3]
    $region25: #{bayesian_conv2d_forward.2} parent=1 // pred_fallthru
      _
    // Predicated region
    $region26: #{bayesian_conv2d_forward.2} parent=1 // pred_check
      _
    $region27: #{bayesian_conv2d_forward.2} parent=1 // pred_check_branch
      %86 = sbr.rel (0) target = $region29
    $region28: #{bayesian_conv2d_forward.2} parent=1 // pred_region
      _
    $region29: #{bayesian_conv2d_forward.2} parent=1 // pred_fallthru
      _
    // Predicated region
    $region30: #{bayesian_conv2d_forward.2} parent=1 // pred_check
      _
    $region31: #{bayesian_conv2d_forward.2} parent=1 // pred_check_branch
      %88 = sbr.rel (0) target = $region33
    $region32: #{bayesian_conv2d_forward.2} parent=1 // pred_region
      %89 = dma.done [#allocation3], 16
    $region33: #{bayesian_conv2d_forward.2} parent=1 // pred_fallthru
      _
    %90 = vsyncpa [#allocation3], 1

// kernel: bayesian_conv2d_forward.3
$region0: #{bayesian_conv2d_forward.3}
  #allocation0 [shape = 'u32[]', space=smem, size = 0x4, offset = 0x4, fixed_abs, tag = 'smem constant byte address 0x4 - core index']
  #allocation1 [shape = 'u32[144,128]{1,0:T(1,128)}', space=vmem, size = 0x12000, scoped, tag = 'internal scratch']
  #allocation2 [shape = 'f32[4,18,18]{2,1,0:T(8,128)}', space=vmem, size = 0xc000, scoped, tag = 'scratch operand']
  %s0 = inlined_call_operand.vmem [shape: f32[2,4,16,16], index: 0, kind: input, shape index: {}]
  %s1 = inlined_call_operand.vmem [shape: bf16[8,37], index: 1, kind: input, shape index: {}]
  %s2 = inlined_call_operand.vmem [shape: f32[2,8,256], index: 2, kind: output, shape index: {}]
  %s3 = sld [smem:[#allocation0]]
  $region45: #{bayesian_conv2d_forward.3} parent=0
    _
  %s5 = ssub.s32 1, %s3
  %s6 = scalar_select 0, %s5, %s3
  loop: start=0, step=1, limit=4
  $region2: #{bayesian_conv2d_forward.3} parent=0 // loop_pre_header
    _
  $region3: #{bayesian_conv2d_forward.3} parent=0 // loop_header
    %s8 = sphi 0, %s12
    %p9 = scmp.ge.s32.totalorder %s8, 4
    %s15 = sphi 0, %s27
    %s16 = sphi 0, %s23
    %s17 = sphi 0, %s15
    %s18 = sphi 0, %s16
    %s19 = sphi 0, %s17
    %s20 = sphi 0, %s18
    %s30 = sphi 0, %s32
    %s33 = sphi 0, %s30
    %s34 = sphi 0, %s33
    %s50 = sphi 0, %s34
    %s54 = sphi 0, %s54
    %s56 = sphi 0, %s54
    %s57 = sphi 0, %s56
    %s71 = sphi 0, %s57
    %s79 = sphi 0, %s81
    %s82 = sphi 0, %s79
    %s83 = sphi 0, %s82
    %s99 = sphi 0, %s83
  $region4: #{bayesian_conv2d_forward.3} parent=0 // loop_header_branch
    %11 = sbr.rel (%p9) target = $region8
  $region5: #{bayesian_conv2d_forward.3} parent=0 // loop_body
    %s13 = ssub.s32 %s8, 1
    %s14 = ssub.s32 %s8, 2
    %s21 = sadd.s32 1, %s16
    %p22 = scmp.ge.s32.totalorder %s21, 1
    %s23 = scalar_select %p22, 0, %s21
    %s24 = sadd.s32 1, %s15
    %s25 = scalar_select %p22, %s24, %s15
    %p26 = scmp.ge.s32.totalorder %s25, 2
    %s27 = scalar_select %p26, 0, %s25
    %s28 = ssub.s32 %s15, %s27
    %p29 = scmp.eq.s32.totalorder %s28, 0
    %s31 = sadd.s32 %s30, 1
    %s32 = scalar_select %p29, %s30, %s31
    %p35 = pneg %p29
    %p36 = scmp.eq.s32.totalorder %s8, 1
    %p37 = por %p35, %p36
    %p38 = scmp.ne.s32.totalorder %s30, %s33
    %p39 = scmp.eq.s32.totalorder %s8, 0
    %p40 = por %p38, %p39
    %p41 = scmp.ne.s32.totalorder %s30, %s33
    %p42 = scmp.eq.s32.totalorder %s13, 1
    %p43 = por %p41, %p42
    %p44 = scmp.ne.s32.totalorder %s33, %s34
    %p45 = scmp.eq.s32.totalorder %s13, 0
    %p46 = por %p44, %p45
    %p47 = scmp.ne.s32.totalorder %s33, %s34
    %p48 = scmp.eq.s32.totalorder %s14, 1
    %p49 = por %p47, %p48
    %p51 = scmp.ne.s32.totalorder %s34, %s50
    %p52 = scmp.eq.s32.totalorder %s14, 0
    %p53 = por %p51, %p52
    %s55 = sadd.s32 %s54, 1
    %p58 = scmp.eq.s32.totalorder %s8, 1
    %p59 = scmp.ne.s32.totalorder %s54, %s56
    %p60 = scmp.eq.s32.totalorder %s8, 0
    %p61 = por %p59, %p60
    %p62 = scmp.ne.s32.totalorder %s54, %s56
    %p63 = scmp.eq.s32.totalorder %s13, 1
    %p64 = por %p62, %p63
    %p65 = scmp.ne.s32.totalorder %s56, %s57
    %p66 = scmp.eq.s32.totalorder %s13, 0
    %p67 = por %p65, %p66
    %p68 = scmp.ne.s32.totalorder %s56, %s57
    %p69 = scmp.eq.s32.totalorder %s14, 1
    %p70 = por %p68, %p69
    %p72 = scmp.ne.s32.totalorder %s57, %s71
    %p73 = scmp.eq.s32.totalorder %s14, 0
    %p74 = por %p72, %p73
    %s75 = ssub.s32 %s15, %s27
    %s76 = ssub.s32 %s16, %s23
    %s77 = sor.u32 %s75, %s76
    %p78 = scmp.eq.s32.totalorder %s77, 0
    %s80 = sadd.s32 %s79, 1
    %s81 = scalar_select %p78, %s79, %s80
    %p84 = pneg %p78
    %p85 = scmp.eq.s32.totalorder %s8, 1
    %p86 = por %p84, %p85
    %p87 = scmp.ne.s32.totalorder %s79, %s82
    %p88 = scmp.eq.s32.totalorder %s8, 0
    %p89 = por %p87, %p88
    %p90 = scmp.ne.s32.totalorder %s79, %s82
    %p91 = scmp.eq.s32.totalorder %s13, 1
    %p92 = por %p90, %p91
    %p93 = scmp.ne.s32.totalorder %s82, %s83
    %p94 = scmp.eq.s32.totalorder %s13, 0
    %p95 = por %p93, %p94
    %p96 = scmp.ne.s32.totalorder %s82, %s83
    %p97 = scmp.eq.s32.totalorder %s14, 1
    %p98 = por %p96, %p97
    %p100 = scmp.ne.s32.totalorder %s83, %s99
    %p101 = scmp.eq.s32.totalorder %s14, 0
    %p102 = por %p100, %p101
    %p103 = scmp.le.s32.totalorder 1, %s8
    %p104 = scmp.lt.s32.totalorder %s8, 3
    %p105 = pnand %p103, %p104
    %p106 = pneg %p105
    // Predicated region
    $region9: #{bayesian_conv2d_forward.3} parent=5 // pred_check
      _
    $region10: #{bayesian_conv2d_forward.3} parent=5 // pred_check_branch
      %108 = sbr.rel (%p105) target = $region12
    $region11: #{bayesian_conv2d_forward.3} parent=5 // pred_region
      %s109 = ssub.s32 %s8, 1
      // Predicated region
      $region13: #{bayesian_conv2d_forward.3} parent=11 // pred_check
        %p110 = pneg %p67
      $region14: #{bayesian_conv2d_forward.3} parent=11 // pred_check_branch
        %112 = sbr.rel (%p110) target = $region16
      $region15: #{bayesian_conv2d_forward.3} parent=11 // pred_region
        _
      $region16: #{bayesian_conv2d_forward.3} parent=11 // pred_fallthru
        _
    $region12: #{bayesian_conv2d_forward.3} parent=5 // pred_fallthru
      _
    %p113 = scmp.lt.s32.totalorder %s8, 2
    // Predicated region
    $region17: #{bayesian_conv2d_forward.3} parent=5 // pred_check
      %p114 = pneg %p113
    $region18: #{bayesian_conv2d_forward.3} parent=5 // pred_check_branch
      %116 = sbr.rel (%p114) target = $region20
    $region19: #{bayesian_conv2d_forward.3} parent=5 // pred_region
      // Predicated region
      $region21: #{bayesian_conv2d_forward.3} parent=19 // pred_check
        %p117 = pneg %p40
      $region22: #{bayesian_conv2d_forward.3} parent=19 // pred_check_branch
        %119 = sbr.rel (%p117) target = $region24
      $region23: #{bayesian_conv2d_forward.3} parent=19 // pred_region
        %p120 = scmp.lt.s32.totalorder %s15, 1
        %s121 = scalar_select %p120, %s15, 1
        %s122 = smul.addr %s121, 8
        %s123 = smul.addr %s122, 8
        %s124 = scalar_lea.vmem %s0, %s123
      $region24: #{bayesian_conv2d_forward.3} parent=19 // pred_fallthru
        _
    $region20: #{bayesian_conv2d_forward.3} parent=5 // pred_fallthru
      _
    %p125 = scmp.le.s32.totalorder 1, %s8
    %p126 = scmp.lt.s32.totalorder %s8, 3
    %p127 = pnand %p125, %p126
    %p128 = pneg %p127
    // Predicated region
    $region25: #{bayesian_conv2d_forward.3} parent=5 // pred_check
      _
    $region26: #{bayesian_conv2d_forward.3} parent=5 // pred_check_branch
      %130 = sbr.rel (%p127) target = $region28
    $region27: #{bayesian_conv2d_forward.3} parent=5 // pred_region
      %s131 = ssub.s32 %s8, 1
      %p132 = scmp.lt.s32.totalorder %s17, 1
      %s133 = scalar_select %p132, %s17, 1
      %s134 = smul.addr %s133, 8
      %s135 = smul.addr %s134, 8
      %s136 = scalar_lea.vmem %s0, %s135
      %p137 = pneg %p46
      %p138 = pneg %p43
      %p139 = pneg %p67
      %p140 = pneg %p64
      %p141 = pneg %p95
      %p142 = pneg %p92
      %s143 = smul.u32 2, %s18
      %p144 = scmp.lt.s32.totalorder %s17, 1
      %s145 = scalar_select %p144, %s17, 1
      %p146 = scmp.lt.s32.totalorder %s143, 1
      %s147 = scalar_select %p146, %s143, 1
      %s148 = smul.addr %s145, 2
      %s149 = sadd.s32 %s147, %s148
      %s150 = smul.addr %s149, 8
      %s151 = scalar_lea.vmem %s2, %s150
      %p152 = scmp.lt.s32.totalorder %s17, 1
      %s153 = scalar_select %p152, %s17, 1
      %s154 = smul.addr %s153, 8
      %s155 = smul.addr %s154, 8
      %s156 = scalar_lea.vmem %s0, %s155
      %s157 = smul.u32 2, %s18
      %p158 = scmp.lt.s32.totalorder %s17, 1
      %s159 = scalar_select %p158, %s17, 1
      %p160 = scmp.lt.s32.totalorder %s157, 1
      %s161 = scalar_select %p160, %s157, 1
      %s162 = smul.addr %s159, 2
      %s163 = sadd.s32 %s161, %s162
      %s164 = smul.addr %s163, 8
      %s165 = scalar_lea.vmem %s2, %s164
      %s166 = smul.u32 2, %s18
      %p168 = scmp.eq.s32.totalorder %s18, 0
      // Predicated region
      $region29: #{bayesian_conv2d_forward.3} parent=27 // pred_check
        %p169 = pneg %p168
      $region30: #{bayesian_conv2d_forward.3} parent=27 // pred_check_branch
        %171 = sbr.rel (%p169) target = $region32
      $region31: #{bayesian_conv2d_forward.3} parent=27 // pred_region
        %vm172 = vcmask 146432
        %173 = vst.msk [vmem:[#allocation2] sm:$0xff] %vm172, 0.0
        %174 = vst.msk [vmem:[#allocation2 + $0x8] sm:$0xff] %vm172, 0.0
        %vm175 = vcmask 140288
        %176 = vst.msk [vmem:[#allocation2 + $0x10] sm:$0x3] %vm175, 0.0
        %177 = vst.msk [vmem:[#allocation2 + $0x18] sm:$0xff] %vm172, 0.0
        %178 = vst.msk [vmem:[#allocation2 + $0x20] sm:$0xff] %vm172, 0.0
        %179 = vst.msk [vmem:[#allocation2 + $0x28] sm:$0x3] %vm175, 0.0
        %180 = vst.msk [vmem:[#allocation2 + $0x30] sm:$0xff] %vm172, 0.0
        %181 = vst.msk [vmem:[#allocation2 + $0x38] sm:$0xff] %vm172, 0.0
        %182 = vst.msk [vmem:[#allocation2 + $0x40] sm:$0x3] %vm175, 0.0
        %183 = vst.msk [vmem:[#allocation2 + $0x48] sm:$0xff] %vm172, 0.0
        %184 = vst.msk [vmem:[#allocation2 + $0x50] sm:$0xff] %vm172, 0.0
        %185 = vst.msk [vmem:[#allocation2 + $0x58] sm:$0x3] %vm175, 0.0
        %v186 = vld [vmem:[%s156] sm:$0xff]
        %v187 = vld [vmem:[%s156 + $0x8] sm:$0xff]
        %v188 = vld [vmem:[%s156 + $0x10] sm:$0xff]
        %v189 = vld [vmem:[%s156 + $0x18] sm:$0xff]
        %v190 = vld [vmem:[%s156 + $0x20] sm:$0xff]
        %v191 = vld [vmem:[%s156 + $0x28] sm:$0xff]
        %v192 = vld [vmem:[%s156 + $0x30] sm:$0xff]
        %v193 = vld [vmem:[%s156 + $0x38] sm:$0xff]
        %202 = vrot.lane.b32.xlu0 %v186, 1
        %v203 = vpop.permute.xlu0 %202
        %204 = vrot.lane.b32.xlu0 %v187, 1
        %v205 = vpop.permute.xlu0 %204
        %206 = vrot.lane.b32.xlu0 %v188, 1
        %v207 = vpop.permute.xlu0 %206
        %208 = vrot.lane.b32.xlu0 %v189, 1
        %v209 = vpop.permute.xlu0 %208
        %210 = vrot.lane.b32.xlu0 %v190, 1
        %v211 = vpop.permute.xlu0 %210
        %212 = vrot.lane.b32.xlu0 %v191, 1
        %v213 = vpop.permute.xlu0 %212
        %214 = vrot.lane.b32.xlu0 %v192, 1
        %v215 = vpop.permute.xlu0 %214
        %216 = vrot.lane.b32.xlu0 %v193, 1
        %v217 = vpop.permute.xlu0 %216
        %vm226 = vcmask 138248
        %227 = vst.msk [vmem:[#allocation2 + $0x1] sm:$0xff] %vm226, %v203
        %228 = vst.msk [vmem:[#allocation2 + $0x9] sm:$0xff] %vm226, %v205
        %229 = vst.msk [vmem:[#allocation2 + $0x19] sm:$0xff] %vm226, %v207
        %230 = vst.msk [vmem:[#allocation2 + $0x21] sm:$0xff] %vm226, %v209
        %231 = vst.msk [vmem:[#allocation2 + $0x31] sm:$0xff] %vm226, %v211
        %232 = vst.msk [vmem:[#allocation2 + $0x39] sm:$0xff] %vm226, %v213
        %233 = vst.msk [vmem:[#allocation2 + $0x49] sm:$0xff] %vm226, %v215
        %234 = vst.msk [vmem:[#allocation2 + $0x51] sm:$0xff] %vm226, %v217
      $region32: #{bayesian_conv2d_forward.3} parent=27 // pred_fallthru
        _
      %s235 = smul.u32 %s18, 16
      %s236 = scalar_lea.vmem [#allocation2], %s235
      %v237 = vld [vmem:[%s236] sm:$0xff]
      %v238 = vld [vmem:[%s236 + $0x8] sm:$0xff]
      %v239 = vld [vmem:[%s236 + $0x18] sm:$0xff]
      %v240 = vld [vmem:[%s236 + $0x20] sm:$0xff]
      %v241 = vld [vmem:[%s236 + $0x30] sm:$0xff]
      %v242 = vld [vmem:[%s236 + $0x38] sm:$0xff]
      %v243 = vld [vmem:[%s236 + $0x48] sm:$0xff]
      %v244 = vld [vmem:[%s236 + $0x50] sm:$0xff]
      %v245 = vcombine.low %v237, %v241
      %v246 = vcombine.high %v237, %v241
      %v248 = vunpack.c.l.s4 1983009808
      %v249 = vunpack.c.0.s8 %v248
      %v250 = vlaneseq
      %v251 = vshrl.u32 %v250, 7
      %v252 = vsub.s32 %v249, %v251
      %v253 = vrot.slane %v245, %v252
      %v255 = vunpack.c.l.s4 1983009808
      %v256 = vunpack.c.0.s8 %v255
      %v257 = vlaneseq
      %v258 = vshrl.u32 %v257, 7
      %v259 = vsub.s32 %v256, %v258
      %v260 = vrot.slane %v246, %v259
      %v261 = vcombine.low %v239, %v243
      %v262 = vcombine.high %v239, %v243
      %v264 = vunpack.c.l.s4 1983009808
      %v265 = vunpack.c.0.s8 %v264
      %v266 = vlaneseq
      %v267 = vshrl.u32 %v266, 7
      %v268 = vsub.s32 %v265, %v267
      %v269 = vrot.slane %v261, %v268
      %v271 = vunpack.c.l.s4 1983009808
      %v272 = vunpack.c.0.s8 %v271
      %v273 = vlaneseq
      %v274 = vshrl.u32 %v273, 7
      %v275 = vsub.s32 %v272, %v274
      %v276 = vrot.slane %v262, %v275
      %v277 = vcombine.low %v253, %v269
      %v278 = vcombine.high %v253, %v269
      %v280 = vunpack.c.l.s4 1934713408
      %v281 = vunpack.c.0.s8 %v280
      %v282 = vlaneseq
      %v283 = vshrl.u32 %v282, 7
      %v284 = vsub.s32 %v281, %v283
      %v285 = vrot.slane %v277, %v284
      %v287 = vunpack.c.l.s4 1934713408
      %v288 = vunpack.c.0.s8 %v287
      %v289 = vlaneseq
      %v290 = vshrl.u32 %v289, 7
      %v291 = vsub.s32 %v288, %v290
      %v292 = vrot.slane %v278, %v291
      %v293 = vcombine.low %v260, %v276
      %v294 = vcombine.high %v260, %v276
      %v296 = vunpack.c.l.s4 1934713408
      %v297 = vunpack.c.0.s8 %v296
      %v298 = vlaneseq
      %v299 = vshrl.u32 %v298, 7
      %v300 = vsub.s32 %v297, %v299
      %v301 = vrot.slane %v293, %v300
      %v303 = vunpack.c.l.s4 1934713408
      %v304 = vunpack.c.0.s8 %v303
      %v305 = vlaneseq
      %v306 = vshrl.u32 %v305, 7
      %v307 = vsub.s32 %v304, %v306
      %v308 = vrot.slane %v294, %v307
      %v309 = vcombine.high %v285, 0.0
      %v310 = vcombine.high %v292, 0.0
      %v311 = vcombine.high %v301, 0.0
      %v312 = vcombine.high %v308, 0.0
      %v313 = vcombine.low %v238, %v242
      %v314 = vcombine.high %v238, %v242
      %v316 = vunpack.c.l.s4 1983009808
      %v317 = vunpack.c.0.s8 %v316
      %v318 = vlaneseq
      %v319 = vshrl.u32 %v318, 7
      %v320 = vsub.s32 %v317, %v319
      %v321 = vrot.slane %v313, %v320
      %v323 = vunpack.c.l.s4 1983009808
      %v324 = vunpack.c.0.s8 %v323
      %v325 = vlaneseq
      %v326 = vshrl.u32 %v325, 7
      %v327 = vsub.s32 %v324, %v326
      %v328 = vrot.slane %v314, %v327
      %v329 = vcombine.low %v240, %v244
      %v330 = vcombine.high %v240, %v244
      %v332 = vunpack.c.l.s4 1983009808
      %v333 = vunpack.c.0.s8 %v332
      %v334 = vlaneseq
      %v335 = vshrl.u32 %v334, 7
      %v336 = vsub.s32 %v333, %v335
      %v337 = vrot.slane %v329, %v336
      %v339 = vunpack.c.l.s4 1983009808
      %v340 = vunpack.c.0.s8 %v339
      %v341 = vlaneseq
      %v342 = vshrl.u32 %v341, 7
      %v343 = vsub.s32 %v340, %v342
      %v344 = vrot.slane %v330, %v343
      %v345 = vcombine.low %v321, %v337
      %v346 = vcombine.high %v321, %v337
      %v348 = vunpack.c.l.s4 1934713408
      %v349 = vunpack.c.0.s8 %v348
      %v350 = vlaneseq
      %v351 = vshrl.u32 %v350, 7
      %v352 = vsub.s32 %v349, %v351
      %v353 = vrot.slane %v345, %v352
      %v355 = vunpack.c.l.s4 1934713408
      %v356 = vunpack.c.0.s8 %v355
      %v357 = vlaneseq
      %v358 = vshrl.u32 %v357, 7
      %v359 = vsub.s32 %v356, %v358
      %v360 = vrot.slane %v346, %v359
      %v361 = vcombine.low %v328, %v344
      %v362 = vcombine.high %v328, %v344
      %v364 = vunpack.c.l.s4 1934713408
      %v365 = vunpack.c.0.s8 %v364
      %v366 = vlaneseq
      %v367 = vshrl.u32 %v366, 7
      %v368 = vsub.s32 %v365, %v367
      %v369 = vrot.slane %v361, %v368
      %v371 = vunpack.c.l.s4 1934713408
      %v372 = vunpack.c.0.s8 %v371
      %v373 = vlaneseq
      %v374 = vshrl.u32 %v373, 7
      %v375 = vsub.s32 %v372, %v374
      %v376 = vrot.slane %v362, %v375
      %v377 = vcombine.high %v353, 0.0
      %v378 = vcombine.high %v360, 0.0
      %v379 = vcombine.high %v369, 0.0
      %v380 = vcombine.high %v376, 0.0
      %382 = vrot.lane.b32.xlu0 %v309, 16
      %v383 = vpop.permute.xlu0 %382
      %386 = vrot.lane.b32.xlu0 %v292, 32
      %v387 = vpop.permute.xlu0 %386
      %390 = vrot.lane.b32.xlu0 %v310, 48
      %v391 = vpop.permute.xlu0 %390
      %394 = vrot.lane.b32.xlu0 %v301, 64
      %v395 = vpop.permute.xlu0 %394
      %398 = vrot.lane.b32.xlu0 %v311, 80
      %v399 = vpop.permute.xlu0 %398
      %402 = vrot.lane.b32.xlu0 %v308, 96
      %v403 = vpop.permute.xlu0 %402
      %406 = vrot.lane.b32.xlu0 %v312, 112
      %v407 = vpop.permute.xlu0 %406
      %410 = vrot.lane.b32.xlu0 %v377, 16
      %v411 = vpop.permute.xlu0 %410
      %414 = vrot.lane.b32.xlu0 %v360, 32
      %v415 = vpop.permute.xlu0 %414
      %418 = vrot.lane.b32.xlu0 %v378, 48
      %v419 = vpop.permute.xlu0 %418
      %422 = vrot.lane.b32.xlu0 %v369, 64
      %v423 = vpop.permute.xlu0 %422
      %426 = vrot.lane.b32.xlu0 %v379, 80
      %v427 = vpop.permute.xlu0 %426
      %430 = vrot.lane.b32.xlu0 %v376, 96
      %v431 = vpop.permute.xlu0 %430
      %434 = vrot.lane.b32.xlu0 %v380, 112
      %v435 = vpop.permute.xlu0 %434
      %vm437 = vcmask 130048
      %v438 = vsel %vm437, %v285, %v383
      %vm439 = vcmask 261120
      %v440 = vsel %vm439, %v438, %v387
      %vm441 = vcmask 392192
      %v442 = vsel %vm441, %v440, %v391
      %vm443 = vcmask 523264
      %v444 = vsel %vm443, %v442, %v395
      %vm445 = vcmask 654336
      %v446 = vsel %vm445, %v444, %v399
      %vm447 = vcmask 785408
      %v448 = vsel %vm447, %v446, %v403
      %vm449 = vcmask 916480
      %v450 = vsel %vm449, %v448, %v407
      %v451 = vsel %vm437, %v353, %v411
      %v452 = vsel %vm439, %v451, %v415
      %v453 = vsel %vm441, %v452, %v419
      %v454 = vsel %vm443, %v453, %v423
      %v455 = vsel %vm445, %v454, %v427
      %v456 = vsel %vm447, %v455, %v431
      %v457 = vsel %vm449, %v456, %v435
      %466 = vrot.lane.b32.xlu0 %v237, 127
      %v467 = vpop.permute.xlu0 %466
      %468 = vrot.lane.b32.xlu0 %v238, 127
      %v469 = vpop.permute.xlu0 %468
      %470 = vrot.lane.b32.xlu0 %v239, 127
      %v471 = vpop.permute.xlu0 %470
      %472 = vrot.lane.b32.xlu0 %v240, 127
      %v473 = vpop.permute.xlu0 %472
      %474 = vrot.lane.b32.xlu0 %v241, 127
      %v475 = vpop.permute.xlu0 %474
      %476 = vrot.lane.b32.xlu0 %v242, 127
      %v477 = vpop.permute.xlu0 %476
      %478 = vrot.lane.b32.xlu0 %v243, 127
      %v479 = vpop.permute.xlu0 %478
      %480 = vrot.lane.b32.xlu0 %v244, 127
      %v481 = vpop.permute.xlu0 %480
      %v490 = vcombine.low %v467, %v475
      %v491 = vcombine.high %v467, %v475
      %v493 = vunpack.c.l.s4 1983009808
      %v494 = vunpack.c.0.s8 %v493
      %v495 = vlaneseq
      %v496 = vshrl.u32 %v495, 7
      %v497 = vsub.s32 %v494, %v496
      %v498 = vrot.slane %v490, %v497
      %v500 = vunpack.c.l.s4 1983009808
      %v501 = vunpack.c.0.s8 %v500
      %v502 = vlaneseq
      %v503 = vshrl.u32 %v502, 7
      %v504 = vsub.s32 %v501, %v503
      %v505 = vrot.slane %v491, %v504
      %v506 = vcombine.low %v471, %v479
      %v507 = vcombine.high %v471, %v479
      %v509 = vunpack.c.l.s4 1983009808
      %v510 = vunpack.c.0.s8 %v509
      %v511 = vlaneseq
      %v512 = vshrl.u32 %v511, 7
      %v513 = vsub.s32 %v510, %v512
      %v514 = vrot.slane %v506, %v513
      %v516 = vunpack.c.l.s4 1983009808
      %v517 = vunpack.c.0.s8 %v516
      %v518 = vlaneseq
      %v519 = vshrl.u32 %v518, 7
      %v520 = vsub.s32 %v517, %v519
      %v521 = vrot.slane %v507, %v520
      %v522 = vcombine.low %v498, %v514
      %v523 = vcombine.high %v498, %v514
      %v525 = vunpack.c.l.s4 1934713408
      %v526 = vunpack.c.0.s8 %v525
      %v527 = vlaneseq
      %v528 = vshrl.u32 %v527, 7
      %v529 = vsub.s32 %v526, %v528
      %v530 = vrot.slane %v522, %v529
      %v532 = vunpack.c.l.s4 1934713408
      %v533 = vunpack.c.0.s8 %v532
      %v534 = vlaneseq
      %v535 = vshrl.u32 %v534, 7
      %v536 = vsub.s32 %v533, %v535
      %v537 = vrot.slane %v523, %v536
      %v538 = vcombine.low %v505, %v521
      %v539 = vcombine.high %v505, %v521
      %v541 = vunpack.c.l.s4 1934713408
      %v542 = vunpack.c.0.s8 %v541
      %v543 = vlaneseq
      %v544 = vshrl.u32 %v543, 7
      %v545 = vsub.s32 %v542, %v544
      %v546 = vrot.slane %v538, %v545
      %v548 = vunpack.c.l.s4 1934713408
      %v549 = vunpack.c.0.s8 %v548
      %v550 = vlaneseq
      %v551 = vshrl.u32 %v550, 7
      %v552 = vsub.s32 %v549, %v551
      %v553 = vrot.slane %v539, %v552
      %v554 = vcombine.high %v530, 0.0
      %v555 = vcombine.high %v537, 0.0
      %v556 = vcombine.high %v546, 0.0
      %v557 = vcombine.high %v553, 0.0
      %v558 = vcombine.low %v469, %v477
      %v559 = vcombine.high %v469, %v477
      %v561 = vunpack.c.l.s4 1983009808
      %v562 = vunpack.c.0.s8 %v561
      %v563 = vlaneseq
      %v564 = vshrl.u32 %v563, 7
      %v565 = vsub.s32 %v562, %v564
      %v566 = vrot.slane %v558, %v565
      %v568 = vunpack.c.l.s4 1983009808
      %v569 = vunpack.c.0.s8 %v568
      %v570 = vlaneseq
      %v571 = vshrl.u32 %v570, 7
      %v572 = vsub.s32 %v569, %v571
      %v573 = vrot.slane %v559, %v572
      %v574 = vcombine.low %v473, %v481
      %v575 = vcombine.high %v473, %v481
      %v577 = vunpack.c.l.s4 1983009808
      %v578 = vunpack.c.0.s8 %v577
      %v579 = vlaneseq
      %v580 = vshrl.u32 %v579, 7
      %v581 = vsub.s32 %v578, %v580
      %v582 = vrot.slane %v574, %v581
      %v584 = vunpack.c.l.s4 1983009808
      %v585 = vunpack.c.0.s8 %v584
      %v586 = vlaneseq
      %v587 = vshrl.u32 %v586, 7
      %v588 = vsub.s32 %v585, %v587
      %v589 = vrot.slane %v575, %v588
      %v590 = vcombine.low %v566, %v582
      %v591 = vcombine.high %v566, %v582
      %v593 = vunpack.c.l.s4 1934713408
      %v594 = vunpack.c.0.s8 %v593
      %v595 = vlaneseq
      %v596 = vshrl.u32 %v595, 7
      %v597 = vsub.s32 %v594, %v596
      %v598 = vrot.slane %v590, %v597
      %v600 = vunpack.c.l.s4 1934713408
      %v601 = vunpack.c.0.s8 %v600
      %v602 = vlaneseq
      %v603 = vshrl.u32 %v602, 7
      %v604 = vsub.s32 %v601, %v603
      %v605 = vrot.slane %v591, %v604
      %v606 = vcombine.low %v573, %v589
      %v607 = vcombine.high %v573, %v589
      %v609 = vunpack.c.l.s4 1934713408
      %v610 = vunpack.c.0.s8 %v609
      %v611 = vlaneseq
      %v612 = vshrl.u32 %v611, 7
      %v613 = vsub.s32 %v610, %v612
      %v614 = vrot.slane %v606, %v613
      %v616 = vunpack.c.l.s4 1934713408
      %v617 = vunpack.c.0.s8 %v616
      %v618 = vlaneseq
      %v619 = vshrl.u32 %v618, 7
      %v620 = vsub.s32 %v617, %v619
      %v621 = vrot.slane %v607, %v620
      %v622 = vcombine.high %v598, 0.0
      %v623 = vcombine.high %v605, 0.0
      %v624 = vcombine.high %v614, 0.0
      %v625 = vcombine.high %v621, 0.0
      %627 = vrot.lane.b32.xlu0 %v554, 16
      %v628 = vpop.permute.xlu0 %627
      %631 = vrot.lane.b32.xlu0 %v537, 32
      %v632 = vpop.permute.xlu0 %631
      %635 = vrot.lane.b32.xlu0 %v555, 48
      %v636 = vpop.permute.xlu0 %635
      %639 = vrot.lane.b32.xlu0 %v546, 64
      %v640 = vpop.permute.xlu0 %639
      %643 = vrot.lane.b32.xlu0 %v556, 80
      %v644 = vpop.permute.xlu0 %643
      %647 = vrot.lane.b32.xlu0 %v553, 96
      %v648 = vpop.permute.xlu0 %647
      %651 = vrot.lane.b32.xlu0 %v557, 112
      %v652 = vpop.permute.xlu0 %651
      %655 = vrot.lane.b32.xlu0 %v622, 16
      %v656 = vpop.permute.xlu0 %655
      %659 = vrot.lane.b32.xlu0 %v605, 32
      %v660 = vpop.permute.xlu0 %659
      %663 = vrot.lane.b32.xlu0 %v623, 48
      %v664 = vpop.permute.xlu0 %663
      %667 = vrot.lane.b32.xlu0 %v614, 64
      %v668 = vpop.permute.xlu0 %667
      %671 = vrot.lane.b32.xlu0 %v624, 80
      %v672 = vpop.permute.xlu0 %671
      %675 = vrot.lane.b32.xlu0 %v621, 96
      %v676 = vpop.permute.xlu0 %675
      %679 = vrot.lane.b32.xlu0 %v625, 112
      %v680 = vpop.permute.xlu0 %679
      %v682 = vsel %vm437, %v530, %v628
      %v683 = vsel %vm439, %v682, %v632
      %v684 = vsel %vm441, %v683, %v636
      %v685 = vsel %vm443, %v684, %v640
      %v686 = vsel %vm445, %v685, %v644
      %v687 = vsel %vm447, %v686, %v648
      %v688 = vsel %vm449, %v687, %v652
      %v689 = vsel %vm437, %v598, %v656
      %v690 = vsel %vm439, %v689, %v660
      %v691 = vsel %vm441, %v690, %v664
      %v692 = vsel %vm443, %v691, %v668
      %v693 = vsel %vm445, %v692, %v672
      %v694 = vsel %vm447, %v693, %v676
      %v695 = vsel %vm449, %v694, %v680
      %696 = vrot.lane.b32.xlu0 %v237, 126
      %v697 = vpop.permute.xlu0 %696
      %698 = vrot.lane.b32.xlu0 %v238, 126
      %v699 = vpop.permute.xlu0 %698
      %700 = vrot.lane.b32.xlu0 %v239, 126
      %v701 = vpop.permute.xlu0 %700
      %702 = vrot.lane.b32.xlu0 %v240, 126
      %v703 = vpop.permute.xlu0 %702
      %704 = vrot.lane.b32.xlu0 %v241, 126
      %v705 = vpop.permute.xlu0 %704
      %706 = vrot.lane.b32.xlu0 %v242, 126
      %v707 = vpop.permute.xlu0 %706
      %708 = vrot.lane.b32.xlu0 %v243, 126
      %v709 = vpop.permute.xlu0 %708
      %710 = vrot.lane.b32.xlu0 %v244, 126
      %v711 = vpop.permute.xlu0 %710
      %v720 = vcombine.low %v697, %v705
      %v721 = vcombine.high %v697, %v705
      %v723 = vunpack.c.l.s4 1983009808
      %v724 = vunpack.c.0.s8 %v723
      %v725 = vlaneseq
      %v726 = vshrl.u32 %v725, 7
      %v727 = vsub.s32 %v724, %v726
      %v728 = vrot.slane %v720, %v727
      %v730 = vunpack.c.l.s4 1983009808
      %v731 = vunpack.c.0.s8 %v730
      %v732 = vlaneseq
      %v733 = vshrl.u32 %v732, 7
      %v734 = vsub.s32 %v731, %v733
      %v735 = vrot.slane %v721, %v734
      %v736 = vcombine.low %v701, %v709
      %v737 = vcombine.high %v701, %v709
      %v739 = vunpack.c.l.s4 1983009808
      %v740 = vunpack.c.0.s8 %v739
      %v741 = vlaneseq
      %v742 = vshrl.u32 %v741, 7
      %v743 = vsub.s32 %v740, %v742
      %v744 = vrot.slane %v736, %v743
      %v746 = vunpack.c.l.s4 1983009808
      %v747 = vunpack.c.0.s8 %v746
      %v748 = vlaneseq
      %v749 = vshrl.u32 %v748, 7
      %v750 = vsub.s32 %v747, %v749
      %v751 = vrot.slane %v737, %v750
      %v752 = vcombine.low %v728, %v744
      %v753 = vcombine.high %v728, %v744
      %v755 = vunpack.c.l.s4 1934713408
      %v756 = vunpack.c.0.s8 %v755
      %v757 = vlaneseq
      %v758 = vshrl.u32 %v757, 7
      %v759 = vsub.s32 %v756, %v758
      %v760 = vrot.slane %v752, %v759
      %v762 = vunpack.c.l.s4 1934713408
      %v763 = vunpack.c.0.s8 %v762
      %v764 = vlaneseq
      %v765 = vshrl.u32 %v764, 7
      %v766 = vsub.s32 %v763, %v765
      %v767 = vrot.slane %v753, %v766
      %v768 = vcombine.low %v735, %v751
      %v769 = vcombine.high %v735, %v751
      %v771 = vunpack.c.l.s4 1934713408
      %v772 = vunpack.c.0.s8 %v771
      %v773 = vlaneseq
      %v774 = vshrl.u32 %v773, 7
      %v775 = vsub.s32 %v772, %v774
      %v776 = vrot.slane %v768, %v775
      %v778 = vunpack.c.l.s4 1934713408
      %v779 = vunpack.c.0.s8 %v778
      %v780 = vlaneseq
      %v781 = vshrl.u32 %v780, 7
      %v782 = vsub.s32 %v779, %v781
      %v783 = vrot.slane %v769, %v782
      %v784 = vcombine.high %v760, 0.0
      %v785 = vcombine.high %v767, 0.0
      %v786 = vcombine.high %v776, 0.0
      %v787 = vcombine.high %v783, 0.0
      %v788 = vcombine.low %v699, %v707
      %v789 = vcombine.high %v699, %v707
      %v791 = vunpack.c.l.s4 1983009808
      %v792 = vunpack.c.0.s8 %v791
      %v793 = vlaneseq
      %v794 = vshrl.u32 %v793, 7
      %v795 = vsub.s32 %v792, %v794
      %v796 = vrot.slane %v788, %v795
      %v798 = vunpack.c.l.s4 1983009808
      %v799 = vunpack.c.0.s8 %v798
      %v800 = vlaneseq
      %v801 = vshrl.u32 %v800, 7
      %v802 = vsub.s32 %v799, %v801
      %v803 = vrot.slane %v789, %v802
      %v804 = vcombine.low %v703, %v711
      %v805 = vcombine.high %v703, %v711
      %v807 = vunpack.c.l.s4 1983009808
      %v808 = vunpack.c.0.s8 %v807
      %v809 = vlaneseq
      %v810 = vshrl.u32 %v809, 7
      %v811 = vsub.s32 %v808, %v810
      %v812 = vrot.slane %v804, %v811
      %v814 = vunpack.c.l.s4 1983009808
      %v815 = vunpack.c.0.s8 %v814
      %v816 = vlaneseq
      %v817 = vshrl.u32 %v816, 7
      %v818 = vsub.s32 %v815, %v817
      %v819 = vrot.slane %v805, %v818
      %v820 = vcombine.low %v796, %v812
      %v821 = vcombine.high %v796, %v812
      %v823 = vunpack.c.l.s4 1934713408
      %v824 = vunpack.c.0.s8 %v823
      %v825 = vlaneseq
      %v826 = vshrl.u32 %v825, 7
      %v827 = vsub.s32 %v824, %v826
      %v828 = vrot.slane %v820, %v827
      %v830 = vunpack.c.l.s4 1934713408
      %v831 = vunpack.c.0.s8 %v830
      %v832 = vlaneseq
      %v833 = vshrl.u32 %v832, 7
      %v834 = vsub.s32 %v831, %v833
      %v835 = vrot.slane %v821, %v834
      %v836 = vcombine.low %v803, %v819
      %v837 = vcombine.high %v803, %v819
      %v839 = vunpack.c.l.s4 1934713408
      %v840 = vunpack.c.0.s8 %v839
      %v841 = vlaneseq
      %v842 = vshrl.u32 %v841, 7
      %v843 = vsub.s32 %v840, %v842
      %v844 = vrot.slane %v836, %v843
      %v846 = vunpack.c.l.s4 1934713408
      %v847 = vunpack.c.0.s8 %v846
      %v848 = vlaneseq
      %v849 = vshrl.u32 %v848, 7
      %v850 = vsub.s32 %v847, %v849
      %v851 = vrot.slane %v837, %v850
      %v852 = vcombine.high %v828, 0.0
      %v853 = vcombine.high %v835, 0.0
      %v854 = vcombine.high %v844, 0.0
      %v855 = vcombine.high %v851, 0.0
      %857 = vrot.lane.b32.xlu0 %v784, 16
      %v858 = vpop.permute.xlu0 %857
      %861 = vrot.lane.b32.xlu0 %v767, 32
      %v862 = vpop.permute.xlu0 %861
      %865 = vrot.lane.b32.xlu0 %v785, 48
      %v866 = vpop.permute.xlu0 %865
      %869 = vrot.lane.b32.xlu0 %v776, 64
      %v870 = vpop.permute.xlu0 %869
      %873 = vrot.lane.b32.xlu0 %v786, 80
      %v874 = vpop.permute.xlu0 %873
      %877 = vrot.lane.b32.xlu0 %v783, 96
      %v878 = vpop.permute.xlu0 %877
      %881 = vrot.lane.b32.xlu0 %v787, 112
      %v882 = vpop.permute.xlu0 %881
      %885 = vrot.lane.b32.xlu0 %v852, 16
      %v886 = vpop.permute.xlu0 %885
      %889 = vrot.lane.b32.xlu0 %v835, 32
      %v890 = vpop.permute.xlu0 %889
      %893 = vrot.lane.b32.xlu0 %v853, 48
      %v894 = vpop.permute.xlu0 %893
      %897 = vrot.lane.b32.xlu0 %v844, 64
      %v898 = vpop.permute.xlu0 %897
      %901 = vrot.lane.b32.xlu0 %v854, 80
      %v902 = vpop.permute.xlu0 %901
      %905 = vrot.lane.b32.xlu0 %v851, 96
      %v906 = vpop.permute.xlu0 %905
      %909 = vrot.lane.b32.xlu0 %v855, 112
      %v910 = vpop.permute.xlu0 %909
      %v912 = vsel %vm437, %v760, %v858
      %v913 = vsel %vm439, %v912, %v862
      %v914 = vsel %vm441, %v913, %v866
      %v915 = vsel %vm443, %v914, %v870
      %v916 = vsel %vm445, %v915, %v874
      %v917 = vsel %vm447, %v916, %v878
      %v918 = vsel %vm449, %v917, %v882
      %v919 = vsel %vm437, %v828, %v886
      %v920 = vsel %vm439, %v919, %v890
      %v921 = vsel %vm441, %v920, %v894
      %v922 = vsel %vm443, %v921, %v898
      %v923 = vsel %vm445, %v922, %v902
      %v924 = vsel %vm447, %v923, %v906
      %v925 = vsel %vm449, %v924, %v910
      %s926 = sadd.s32 %s235, 1
      %s927 = scalar_lea.vmem [#allocation2], %s926
      %v928 = vld [vmem:[%s927] sm:$0xff]
      %v929 = vld [vmem:[%s927 + $0x8] sm:$0xff]
      %v930 = vld [vmem:[%s927 + $0x18] sm:$0xff]
      %v931 = vld [vmem:[%s927 + $0x20] sm:$0xff]
      %v932 = vld [vmem:[%s927 + $0x30] sm:$0xff]
      %v933 = vld [vmem:[%s927 + $0x38] sm:$0xff]
      %v934 = vld [vmem:[%s927 + $0x48] sm:$0xff]
      %v935 = vld [vmem:[%s927 + $0x50] sm:$0xff]
      %v936 = vcombine.low %v928, %v932
      %v937 = vcombine.high %v928, %v932
      %v939 = vunpack.c.l.s4 1983009808
      %v940 = vunpack.c.0.s8 %v939
      %v941 = vlaneseq
      %v942 = vshrl.u32 %v941, 7
      %v943 = vsub.s32 %v940, %v942
      %v944 = vrot.slane %v936, %v943
      %v946 = vunpack.c.l.s4 1983009808
      %v947 = vunpack.c.0.s8 %v946
      %v948 = vlaneseq
      %v949 = vshrl.u32 %v948, 7
      %v950 = vsub.s32 %v947, %v949
      %v951 = vrot.slane %v937, %v950
      %v952 = vcombine.low %v930, %v934
      %v953 = vcombine.high %v930, %v934
      %v955 = vunpack.c.l.s4 1983009808
      %v956 = vunpack.c.0.s8 %v955
      %v957 = vlaneseq
      %v958 = vshrl.u32 %v957, 7
      %v959 = vsub.s32 %v956, %v958
      %v960 = vrot.slane %v952, %v959
      %v962 = vunpack.c.l.s4 1983009808
      %v963 = vunpack.c.0.s8 %v962
      %v964 = vlaneseq
      %v965 = vshrl.u32 %v964, 7
      %v966 = vsub.s32 %v963, %v965
      %v967 = vrot.slane %v953, %v966
      %v968 = vcombine.low %v944, %v960
      %v969 = vcombine.high %v944, %v960
      %v971 = vunpack.c.l.s4 1934713408
      %v972 = vunpack.c.0.s8 %v971
      %v973 = vlaneseq
      %v974 = vshrl.u32 %v973, 7
      %v975 = vsub.s32 %v972, %v974
      %v976 = vrot.slane %v968, %v975
      %v978 = vunpack.c.l.s4 1934713408
      %v979 = vunpack.c.0.s8 %v978
      %v980 = vlaneseq
      %v981 = vshrl.u32 %v980, 7
      %v982 = vsub.s32 %v979, %v981
      %v983 = vrot.slane %v969, %v982
      %v984 = vcombine.low %v951, %v967
      %v985 = vcombine.high %v951, %v967
      %v987 = vunpack.c.l.s4 1934713408
      %v988 = vunpack.c.0.s8 %v987
      %v989 = vlaneseq
      %v990 = vshrl.u32 %v989, 7
      %v991 = vsub.s32 %v988, %v990
      %v992 = vrot.slane %v984, %v991
      %v994 = vunpack.c.l.s4 1934713408
      %v995 = vunpack.c.0.s8 %v994
      %v996 = vlaneseq
      %v997 = vshrl.u32 %v996, 7
      %v998 = vsub.s32 %v995, %v997
      %v999 = vrot.slane %v985, %v998
      %v1000 = vcombine.high %v976, 0.0
      %v1001 = vcombine.high %v983, 0.0
      %v1002 = vcombine.high %v992, 0.0
      %v1003 = vcombine.high %v999, 0.0
      %v1004 = vcombine.low %v929, %v933
      %v1005 = vcombine.high %v929, %v933
      %v1007 = vunpack.c.l.s4 1983009808
      %v1008 = vunpack.c.0.s8 %v1007
      %v1009 = vlaneseq
      %v1010 = vshrl.u32 %v1009, 7
      %v1011 = vsub.s32 %v1008, %v1010
      %v1012 = vrot.slane %v1004, %v1011
      %v1014 = vunpack.c.l.s4 1983009808
      %v1015 = vunpack.c.0.s8 %v1014
      %v1016 = vlaneseq
      %v1017 = vshrl.u32 %v1016, 7
      %v1018 = vsub.s32 %v1015, %v1017
      %v1019 = vrot.slane %v1005, %v1018
      %v1020 = vcombine.low %v931, %v935
      %v1021 = vcombine.high %v931, %v935
      %v1023 = vunpack.c.l.s4 1983009808
      %v1024 = vunpack.c.0.s8 %v1023
      %v1025 = vlaneseq
      %v1026 = vshrl.u32 %v1025, 7
      %v1027 = vsub.s32 %v1024, %v1026
      %v1028 = vrot.slane %v1020, %v1027
      %v1030 = vunpack.c.l.s4 1983009808
      %v1031 = vunpack.c.0.s8 %v1030
      %v1032 = vlaneseq
      %v1033 = vshrl.u32 %v1032, 7
      %v1034 = vsub.s32 %v1031, %v1033
      %v1035 = vrot.slane %v1021, %v1034
      %v1036 = vcombine.low %v1012, %v1028
      %v1037 = vcombine.high %v1012, %v1028
      %v1039 = vunpack.c.l.s4 1934713408
      %v1040 = vunpack.c.0.s8 %v1039
      %v1041 = vlaneseq
      %v1042 = vshrl.u32 %v1041, 7
      %v1043 = vsub.s32 %v1040, %v1042
      %v1044 = vrot.slane %v1036, %v1043
      %v1046 = vunpack.c.l.s4 1934713408
      %v1047 = vunpack.c.0.s8 %v1046
      %v1048 = vlaneseq
      %v1049 = vshrl.u32 %v1048, 7
      %v1050 = vsub.s32 %v1047, %v1049
      %v1051 = vrot.slane %v1037, %v1050
      %v1052 = vcombine.low %v1019, %v1035
      %v1053 = vcombine.high %v1019, %v1035
      %v1055 = vunpack.c.l.s4 1934713408
      %v1056 = vunpack.c.0.s8 %v1055
      %v1057 = vlaneseq
      %v1058 = vshrl.u32 %v1057, 7
      %v1059 = vsub.s32 %v1056, %v1058
      %v1060 = vrot.slane %v1052, %v1059
      %v1062 = vunpack.c.l.s4 1934713408
      %v1063 = vunpack.c.0.s8 %v1062
      %v1064 = vlaneseq
      %v1065 = vshrl.u32 %v1064, 7
      %v1066 = vsub.s32 %v1063, %v1065
      %v1067 = vrot.slane %v1053, %v1066
      %v1068 = vcombine.high %v1044, 0.0
      %v1069 = vcombine.high %v1051, 0.0
      %v1070 = vcombine.high %v1060, 0.0
      %v1071 = vcombine.high %v1067, 0.0
      %1073 = vrot.lane.b32.xlu0 %v1000, 16
      %v1074 = vpop.permute.xlu0 %1073
      %1077 = vrot.lane.b32.xlu0 %v983, 32
      %v1078 = vpop.permute.xlu0 %1077
      %1081 = vrot.lane.b32.xlu0 %v1001, 48
      %v1082 = vpop.permute.xlu0 %1081
      %1085 = vrot.lane.b32.xlu0 %v992, 64
      %v1086 = vpop.permute.xlu0 %1085
      %1089 = vrot.lane.b32.xlu0 %v1002, 80
      %v1090 = vpop.permute.xlu0 %1089
      %1093 = vrot.lane.b32.xlu0 %v999, 96
      %v1094 = vpop.permute.xlu0 %1093
      %1097 = vrot.lane.b32.xlu0 %v1003, 112
      %v1098 = vpop.permute.xlu0 %1097
      %1101 = vrot.lane.b32.xlu0 %v1068, 16
      %v1102 = vpop.permute.xlu0 %1101
      %1105 = vrot.lane.b32.xlu0 %v1051, 32
      %v1106 = vpop.permute.xlu0 %1105
      %1109 = vrot.lane.b32.xlu0 %v1069, 48
      %v1110 = vpop.permute.xlu0 %1109
      %1113 = vrot.lane.b32.xlu0 %v1060, 64
      %v1114 = vpop.permute.xlu0 %1113
      %1117 = vrot.lane.b32.xlu0 %v1070, 80
      %v1118 = vpop.permute.xlu0 %1117
      %1121 = vrot.lane.b32.xlu0 %v1067, 96
      %v1122 = vpop.permute.xlu0 %1121
      %1125 = vrot.lane.b32.xlu0 %v1071, 112
      %v1126 = vpop.permute.xlu0 %1125
      %v1128 = vsel %vm437, %v976, %v1074
      %v1129 = vsel %vm439, %v1128, %v1078
      %v1130 = vsel %vm441, %v1129, %v1082
      %v1131 = vsel %vm443, %v1130, %v1086
      %v1132 = vsel %vm445, %v1131, %v1090
      %v1133 = vsel %vm447, %v1132, %v1094
      %v1134 = vsel %vm449, %v1133, %v1098
      %v1135 = vsel %vm437, %v1044, %v1102
      %v1136 = vsel %vm439, %v1135, %v1106
      %v1137 = vsel %vm441, %v1136, %v1110
      %v1138 = vsel %vm443, %v1137, %v1114
      %v1139 = vsel %vm445, %v1138, %v1118
      %v1140 = vsel %vm447, %v1139, %v1122
      %v1141 = vsel %vm449, %v1140, %v1126
      %1150 = vrot.lane.b32.xlu0 %v928, 127
      %v1151 = vpop.permute.xlu0 %1150
      %1152 = vrot.lane.b32.xlu0 %v929, 127
      %v1153 = vpop.permute.xlu0 %1152
      %1154 = vrot.lane.b32.xlu0 %v930, 127
      %v1155 = vpop.permute.xlu0 %1154
      %1156 = vrot.lane.b32.xlu0 %v931, 127
      %v1157 = vpop.permute.xlu0 %1156
      %1158 = vrot.lane.b32.xlu0 %v932, 127
      %v1159 = vpop.permute.xlu0 %1158
      %1160 = vrot.lane.b32.xlu0 %v933, 127
      %v1161 = vpop.permute.xlu0 %1160
      %1162 = vrot.lane.b32.xlu0 %v934, 127
      %v1163 = vpop.permute.xlu0 %1162
      %1164 = vrot.lane.b32.xlu0 %v935, 127
      %v1165 = vpop.permute.xlu0 %1164
      %v1174 = vcombine.low %v1151, %v1159
      %v1175 = vcombine.high %v1151, %v1159
      %v1177 = vunpack.c.l.s4 1983009808
      %v1178 = vunpack.c.0.s8 %v1177
      %v1179 = vlaneseq
      %v1180 = vshrl.u32 %v1179, 7
      %v1181 = vsub.s32 %v1178, %v1180
      %v1182 = vrot.slane %v1174, %v1181
      %v1184 = vunpack.c.l.s4 1983009808
      %v1185 = vunpack.c.0.s8 %v1184
      %v1186 = vlaneseq
      %v1187 = vshrl.u32 %v1186, 7
      %v1188 = vsub.s32 %v1185, %v1187
      %v1189 = vrot.slane %v1175, %v1188
      %v1190 = vcombine.low %v1155, %v1163
      %v1191 = vcombine.high %v1155, %v1163
      %v1193 = vunpack.c.l.s4 1983009808
      %v1194 = vunpack.c.0.s8 %v1193
      %v1195 = vlaneseq
      %v1196 = vshrl.u32 %v1195, 7
      %v1197 = vsub.s32 %v1194, %v1196
      %v1198 = vrot.slane %v1190, %v1197
      %v1200 = vunpack.c.l.s4 1983009808
      %v1201 = vunpack.c.0.s8 %v1200
      %v1202 = vlaneseq
      %v1203 = vshrl.u32 %v1202, 7
      %v1204 = vsub.s32 %v1201, %v1203
      %v1205 = vrot.slane %v1191, %v1204
      %v1206 = vcombine.low %v1182, %v1198
      %v1207 = vcombine.high %v1182, %v1198
      %v1209 = vunpack.c.l.s4 1934713408
      %v1210 = vunpack.c.0.s8 %v1209
      %v1211 = vlaneseq
      %v1212 = vshrl.u32 %v1211, 7
      %v1213 = vsub.s32 %v1210, %v1212
      %v1214 = vrot.slane %v1206, %v1213
      %v1216 = vunpack.c.l.s4 1934713408
      %v1217 = vunpack.c.0.s8 %v1216
      %v1218 = vlaneseq
      %v1219 = vshrl.u32 %v1218, 7
      %v1220 = vsub.s32 %v1217, %v1219
      %v1221 = vrot.slane %v1207, %v1220
      %v1222 = vcombine.low %v1189, %v1205
      %v1223 = vcombine.high %v1189, %v1205
      %v1225 = vunpack.c.l.s4 1934713408
      %v1226 = vunpack.c.0.s8 %v1225
      %v1227 = vlaneseq
      %v1228 = vshrl.u32 %v1227, 7
      %v1229 = vsub.s32 %v1226, %v1228
      %v1230 = vrot.slane %v1222, %v1229
      %v1232 = vunpack.c.l.s4 1934713408
      %v1233 = vunpack.c.0.s8 %v1232
      %v1234 = vlaneseq
      %v1235 = vshrl.u32 %v1234, 7
      %v1236 = vsub.s32 %v1233, %v1235
      %v1237 = vrot.slane %v1223, %v1236
      %v1238 = vcombine.high %v1214, 0.0
      %v1239 = vcombine.high %v1221, 0.0
      %v1240 = vcombine.high %v1230, 0.0
      %v1241 = vcombine.high %v1237, 0.0
      %v1242 = vcombine.low %v1153, %v1161
      %v1243 = vcombine.high %v1153, %v1161
      %v1245 = vunpack.c.l.s4 1983009808
      %v1246 = vunpack.c.0.s8 %v1245
      %v1247 = vlaneseq
      %v1248 = vshrl.u32 %v1247, 7
      %v1249 = vsub.s32 %v1246, %v1248
      %v1250 = vrot.slane %v1242, %v1249
      %v1252 = vunpack.c.l.s4 1983009808
      %v1253 = vunpack.c.0.s8 %v1252
      %v1254 = vlaneseq
      %v1255 = vshrl.u32 %v1254, 7
      %v1256 = vsub.s32 %v1253, %v1255
      %v1257 = vrot.slane %v1243, %v1256
      %v1258 = vcombine.low %v1157, %v1165
      %v1259 = vcombine.high %v1157, %v1165
      %v1261 = vunpack.c.l.s4 1983009808
      %v1262 = vunpack.c.0.s8 %v1261
      %v1263 = vlaneseq
      %v1264 = vshrl.u32 %v1263, 7
      %v1265 = vsub.s32 %v1262, %v1264
      %v1266 = vrot.slane %v1258, %v1265
      %v1268 = vunpack.c.l.s4 1983009808
      %v1269 = vunpack.c.0.s8 %v1268
      %v1270 = vlaneseq
      %v1271 = vshrl.u32 %v1270, 7
      %v1272 = vsub.s32 %v1269, %v1271
      %v1273 = vrot.slane %v1259, %v1272
      %v1274 = vcombine.low %v1250, %v1266
      %v1275 = vcombine.high %v1250, %v1266
      %v1277 = vunpack.c.l.s4 1934713408
      %v1278 = vunpack.c.0.s8 %v1277
      %v1279 = vlaneseq
      %v1280 = vshrl.u32 %v1279, 7
      %v1281 = vsub.s32 %v1278, %v1280
      %v1282 = vrot.slane %v1274, %v1281
      %v1284 = vunpack.c.l.s4 1934713408
      %v1285 = vunpack.c.0.s8 %v1284
      %v1286 = vlaneseq
      %v1287 = vshrl.u32 %v1286, 7
      %v1288 = vsub.s32 %v1285, %v1287
      %v1289 = vrot.slane %v1275, %v1288
      %v1290 = vcombine.low %v1257, %v1273
      %v1291 = vcombine.high %v1257, %v1273
      %v1293 = vunpack.c.l.s4 1934713408
      %v1294 = vunpack.c.0.s8 %v1293
      %v1295 = vlaneseq
      %v1296 = vshrl.u32 %v1295, 7
      %v1297 = vsub.s32 %v1294, %v1296
      %v1298 = vrot.slane %v1290, %v1297
      %v1300 = vunpack.c.l.s4 1934713408
      %v1301 = vunpack.c.0.s8 %v1300
      %v1302 = vlaneseq
      %v1303 = vshrl.u32 %v1302, 7
      %v1304 = vsub.s32 %v1301, %v1303
      %v1305 = vrot.slane %v1291, %v1304
      %v1306 = vcombine.high %v1282, 0.0
      %v1307 = vcombine.high %v1289, 0.0
      %v1308 = vcombine.high %v1298, 0.0
      %v1309 = vcombine.high %v1305, 0.0
      %1311 = vrot.lane.b32.xlu0 %v1238, 16
      %v1312 = vpop.permute.xlu0 %1311
      %1315 = vrot.lane.b32.xlu0 %v1221, 32
      %v1316 = vpop.permute.xlu0 %1315
      %1319 = vrot.lane.b32.xlu0 %v1239, 48
      %v1320 = vpop.permute.xlu0 %1319
      %1323 = vrot.lane.b32.xlu0 %v1230, 64
      %v1324 = vpop.permute.xlu0 %1323
      %1327 = vrot.lane.b32.xlu0 %v1240, 80
      %v1328 = vpop.permute.xlu0 %1327
      %1331 = vrot.lane.b32.xlu0 %v1237, 96
      %v1332 = vpop.permute.xlu0 %1331
      %1335 = vrot.lane.b32.xlu0 %v1241, 112
      %v1336 = vpop.permute.xlu0 %1335
      %1339 = vrot.lane.b32.xlu0 %v1306, 16
      %v1340 = vpop.permute.xlu0 %1339
      %1343 = vrot.lane.b32.xlu0 %v1289, 32
      %v1344 = vpop.permute.xlu0 %1343
      %1347 = vrot.lane.b32.xlu0 %v1307, 48
      %v1348 = vpop.permute.xlu0 %1347
      %1351 = vrot.lane.b32.xlu0 %v1298, 64
      %v1352 = vpop.permute.xlu0 %1351
      %1355 = vrot.lane.b32.xlu0 %v1308, 80
      %v1356 = vpop.permute.xlu0 %1355
      %1359 = vrot.lane.b32.xlu0 %v1305, 96
      %v1360 = vpop.permute.xlu0 %1359
      %1363 = vrot.lane.b32.xlu0 %v1309, 112
      %v1364 = vpop.permute.xlu0 %1363
      %v1366 = vsel %vm437, %v1214, %v1312
      %v1367 = vsel %vm439, %v1366, %v1316
      %v1368 = vsel %vm441, %v1367, %v1320
      %v1369 = vsel %vm443, %v1368, %v1324
      %v1370 = vsel %vm445, %v1369, %v1328
      %v1371 = vsel %vm447, %v1370, %v1332
      %v1372 = vsel %vm449, %v1371, %v1336
      %v1373 = vsel %vm437, %v1282, %v1340
      %v1374 = vsel %vm439, %v1373, %v1344
      %v1375 = vsel %vm441, %v1374, %v1348
      %v1376 = vsel %vm443, %v1375, %v1352
      %v1377 = vsel %vm445, %v1376, %v1356
      %v1378 = vsel %vm447, %v1377, %v1360
      %v1379 = vsel %vm449, %v1378, %v1364
      %1380 = vrot.lane.b32.xlu0 %v928, 126
      %v1381 = vpop.permute.xlu0 %1380
      %1382 = vrot.lane.b32.xlu0 %v929, 126
      %v1383 = vpop.permute.xlu0 %1382
      %1384 = vrot.lane.b32.xlu0 %v930, 126
      %v1385 = vpop.permute.xlu0 %1384
      %1386 = vrot.lane.b32.xlu0 %v931, 126
      %v1387 = vpop.permute.xlu0 %1386
      %1388 = vrot.lane.b32.xlu0 %v932, 126
      %v1389 = vpop.permute.xlu0 %1388
      %1390 = vrot.lane.b32.xlu0 %v933, 126
      %v1391 = vpop.permute.xlu0 %1390
      %1392 = vrot.lane.b32.xlu0 %v934, 126
      %v1393 = vpop.permute.xlu0 %1392
      %1394 = vrot.lane.b32.xlu0 %v935, 126
      %v1395 = vpop.permute.xlu0 %1394
      %v1404 = vcombine.low %v1381, %v1389
      %v1405 = vcombine.high %v1381, %v1389
      %v1407 = vunpack.c.l.s4 1983009808
      %v1408 = vunpack.c.0.s8 %v1407
      %v1409 = vlaneseq
      %v1410 = vshrl.u32 %v1409, 7
      %v1411 = vsub.s32 %v1408, %v1410
      %v1412 = vrot.slane %v1404, %v1411
      %v1414 = vunpack.c.l.s4 1983009808
      %v1415 = vunpack.c.0.s8 %v1414
      %v1416 = vlaneseq
      %v1417 = vshrl.u32 %v1416, 7
      %v1418 = vsub.s32 %v1415, %v1417
      %v1419 = vrot.slane %v1405, %v1418
      %v1420 = vcombine.low %v1385, %v1393
      %v1421 = vcombine.high %v1385, %v1393
      %v1423 = vunpack.c.l.s4 1983009808
      %v1424 = vunpack.c.0.s8 %v1423
      %v1425 = vlaneseq
      %v1426 = vshrl.u32 %v1425, 7
      %v1427 = vsub.s32 %v1424, %v1426
      %v1428 = vrot.slane %v1420, %v1427
      %v1430 = vunpack.c.l.s4 1983009808
      %v1431 = vunpack.c.0.s8 %v1430
      %v1432 = vlaneseq
      %v1433 = vshrl.u32 %v1432, 7
      %v1434 = vsub.s32 %v1431, %v1433
      %v1435 = vrot.slane %v1421, %v1434
      %v1436 = vcombine.low %v1412, %v1428
      %v1437 = vcombine.high %v1412, %v1428
      %v1439 = vunpack.c.l.s4 1934713408
      %v1440 = vunpack.c.0.s8 %v1439
      %v1441 = vlaneseq
      %v1442 = vshrl.u32 %v1441, 7
      %v1443 = vsub.s32 %v1440, %v1442
      %v1444 = vrot.slane %v1436, %v1443
      %v1446 = vunpack.c.l.s4 1934713408
      %v1447 = vunpack.c.0.s8 %v1446
      %v1448 = vlaneseq
      %v1449 = vshrl.u32 %v1448, 7
      %v1450 = vsub.s32 %v1447, %v1449
      %v1451 = vrot.slane %v1437, %v1450
      %v1452 = vcombine.low %v1419, %v1435
      %v1453 = vcombine.high %v1419, %v1435
      %v1455 = vunpack.c.l.s4 1934713408
      %v1456 = vunpack.c.0.s8 %v1455
      %v1457 = vlaneseq
      %v1458 = vshrl.u32 %v1457, 7
      %v1459 = vsub.s32 %v1456, %v1458
      %v1460 = vrot.slane %v1452, %v1459
      %v1462 = vunpack.c.l.s4 1934713408
      %v1463 = vunpack.c.0.s8 %v1462
      %v1464 = vlaneseq
      %v1465 = vshrl.u32 %v1464, 7
      %v1466 = vsub.s32 %v1463, %v1465
      %v1467 = vrot.slane %v1453, %v1466
      %v1468 = vcombine.high %v1444, 0.0
      %v1469 = vcombine.high %v1451, 0.0
      %v1470 = vcombine.high %v1460, 0.0
      %v1471 = vcombine.high %v1467, 0.0
      %v1472 = vcombine.low %v1383, %v1391
      %v1473 = vcombine.high %v1383, %v1391
      %v1475 = vunpack.c.l.s4 1983009808
      %v1476 = vunpack.c.0.s8 %v1475
      %v1477 = vlaneseq
      %v1478 = vshrl.u32 %v1477, 7
      %v1479 = vsub.s32 %v1476, %v1478
      %v1480 = vrot.slane %v1472, %v1479
      %v1482 = vunpack.c.l.s4 1983009808
      %v1483 = vunpack.c.0.s8 %v1482
      %v1484 = vlaneseq
      %v1485 = vshrl.u32 %v1484, 7
      %v1486 = vsub.s32 %v1483, %v1485
      %v1487 = vrot.slane %v1473, %v1486
      %v1488 = vcombine.low %v1387, %v1395
      %v1489 = vcombine.high %v1387, %v1395
      %v1491 = vunpack.c.l.s4 1983009808
      %v1492 = vunpack.c.0.s8 %v1491
      %v1493 = vlaneseq
      %v1494 = vshrl.u32 %v1493, 7
      %v1495 = vsub.s32 %v1492, %v1494
      %v1496 = vrot.slane %v1488, %v1495
      %v1498 = vunpack.c.l.s4 1983009808
      %v1499 = vunpack.c.0.s8 %v1498
      %v1500 = vlaneseq
      %v1501 = vshrl.u32 %v1500, 7
      %v1502 = vsub.s32 %v1499, %v1501
      %v1503 = vrot.slane %v1489, %v1502
      %v1504 = vcombine.low %v1480, %v1496
      %v1505 = vcombine.high %v1480, %v1496
      %v1507 = vunpack.c.l.s4 1934713408
      %v1508 = vunpack.c.0.s8 %v1507
      %v1509 = vlaneseq
      %v1510 = vshrl.u32 %v1509, 7
      %v1511 = vsub.s32 %v1508, %v1510
      %v1512 = vrot.slane %v1504, %v1511
      %v1514 = vunpack.c.l.s4 1934713408
      %v1515 = vunpack.c.0.s8 %v1514
      %v1516 = vlaneseq
      %v1517 = vshrl.u32 %v1516, 7
      %v1518 = vsub.s32 %v1515, %v1517
      %v1519 = vrot.slane %v1505, %v1518
      %v1520 = vcombine.low %v1487, %v1503
      %v1521 = vcombine.high %v1487, %v1503
      %v1523 = vunpack.c.l.s4 1934713408
      %v1524 = vunpack.c.0.s8 %v1523
      %v1525 = vlaneseq
      %v1526 = vshrl.u32 %v1525, 7
      %v1527 = vsub.s32 %v1524, %v1526
      %v1528 = vrot.slane %v1520, %v1527
      %v1530 = vunpack.c.l.s4 1934713408
      %v1531 = vunpack.c.0.s8 %v1530
      %v1532 = vlaneseq
      %v1533 = vshrl.u32 %v1532, 7
      %v1534 = vsub.s32 %v1531, %v1533
      %v1535 = vrot.slane %v1521, %v1534
      %v1536 = vcombine.high %v1512, 0.0
      %v1537 = vcombine.high %v1519, 0.0
      %v1538 = vcombine.high %v1528, 0.0
      %v1539 = vcombine.high %v1535, 0.0
      %1541 = vrot.lane.b32.xlu0 %v1468, 16
      %v1542 = vpop.permute.xlu0 %1541
      %1545 = vrot.lane.b32.xlu0 %v1451, 32
      %v1546 = vpop.permute.xlu0 %1545
      %1549 = vrot.lane.b32.xlu0 %v1469, 48
      %v1550 = vpop.permute.xlu0 %1549
      %1553 = vrot.lane.b32.xlu0 %v1460, 64
      %v1554 = vpop.permute.xlu0 %1553
      %1557 = vrot.lane.b32.xlu0 %v1470, 80
      %v1558 = vpop.permute.xlu0 %1557
      %1561 = vrot.lane.b32.xlu0 %v1467, 96
      %v1562 = vpop.permute.xlu0 %1561
      %1565 = vrot.lane.b32.xlu0 %v1471, 112
      %v1566 = vpop.permute.xlu0 %1565
      %1569 = vrot.lane.b32.xlu0 %v1536, 16
      %v1570 = vpop.permute.xlu0 %1569
      %1573 = vrot.lane.b32.xlu0 %v1519, 32
      %v1574 = vpop.permute.xlu0 %1573
      %1577 = vrot.lane.b32.xlu0 %v1537, 48
      %v1578 = vpop.permute.xlu0 %1577
      %1581 = vrot.lane.b32.xlu0 %v1528, 64
      %v1582 = vpop.permute.xlu0 %1581
      %1585 = vrot.lane.b32.xlu0 %v1538, 80
      %v1586 = vpop.permute.xlu0 %1585
      %1589 = vrot.lane.b32.xlu0 %v1535, 96
      %v1590 = vpop.permute.xlu0 %1589
      %1593 = vrot.lane.b32.xlu0 %v1539, 112
      %v1594 = vpop.permute.xlu0 %1593
      %v1596 = vsel %vm437, %v1444, %v1542
      %v1597 = vsel %vm439, %v1596, %v1546
      %v1598 = vsel %vm441, %v1597, %v1550
      %v1599 = vsel %vm443, %v1598, %v1554
      %v1600 = vsel %vm445, %v1599, %v1558
      %v1601 = vsel %vm447, %v1600, %v1562
      %v1602 = vsel %vm449, %v1601, %v1566
      %v1603 = vsel %vm437, %v1512, %v1570
      %v1604 = vsel %vm439, %v1603, %v1574
      %v1605 = vsel %vm441, %v1604, %v1578
      %v1606 = vsel %vm443, %v1605, %v1582
      %v1607 = vsel %vm445, %v1606, %v1586
      %v1608 = vsel %vm447, %v1607, %v1590
      %v1609 = vsel %vm449, %v1608, %v1594
      %s1610 = sadd.s32 %s235, 2
      %s1611 = scalar_lea.vmem [#allocation2], %s1610
      %v1612 = vld [vmem:[%s1611] sm:$0xff]
      %v1613 = vld [vmem:[%s1611 + $0x8] sm:$0xff]
      %v1614 = vld [vmem:[%s1611 + $0x18] sm:$0xff]
      %v1615 = vld [vmem:[%s1611 + $0x20] sm:$0xff]
      %v1616 = vld [vmem:[%s1611 + $0x30] sm:$0xff]
      %v1617 = vld [vmem:[%s1611 + $0x38] sm:$0xff]
      %v1618 = vld [vmem:[%s1611 + $0x48] sm:$0xff]
      %v1619 = vld [vmem:[%s1611 + $0x50] sm:$0xff]
      %v1620 = vcombine.low %v1612, %v1616
      %v1621 = vcombine.high %v1612, %v1616
      %v1623 = vunpack.c.l.s4 1983009808
      %v1624 = vunpack.c.0.s8 %v1623
      %v1625 = vlaneseq
      %v1626 = vshrl.u32 %v1625, 7
      %v1627 = vsub.s32 %v1624, %v1626
      %v1628 = vrot.slane %v1620, %v1627
      %v1630 = vunpack.c.l.s4 1983009808
      %v1631 = vunpack.c.0.s8 %v1630
      %v1632 = vlaneseq
      %v1633 = vshrl.u32 %v1632, 7
      %v1634 = vsub.s32 %v1631, %v1633
      %v1635 = vrot.slane %v1621, %v1634
      %v1636 = vcombine.low %v1614, %v1618
      %v1637 = vcombine.high %v1614, %v1618
      %v1639 = vunpack.c.l.s4 1983009808
      %v1640 = vunpack.c.0.s8 %v1639
      %v1641 = vlaneseq
      %v1642 = vshrl.u32 %v1641, 7
      %v1643 = vsub.s32 %v1640, %v1642
      %v1644 = vrot.slane %v1636, %v1643
      %v1646 = vunpack.c.l.s4 1983009808
      %v1647 = vunpack.c.0.s8 %v1646
      %v1648 = vlaneseq
      %v1649 = vshrl.u32 %v1648, 7
      %v1650 = vsub.s32 %v1647, %v1649
      %v1651 = vrot.slane %v1637, %v1650
      %v1652 = vcombine.low %v1628, %v1644
      %v1653 = vcombine.high %v1628, %v1644
      %v1655 = vunpack.c.l.s4 1934713408
      %v1656 = vunpack.c.0.s8 %v1655
      %v1657 = vlaneseq
      %v1658 = vshrl.u32 %v1657, 7
      %v1659 = vsub.s32 %v1656, %v1658
      %v1660 = vrot.slane %v1652, %v1659
      %v1662 = vunpack.c.l.s4 1934713408
      %v1663 = vunpack.c.0.s8 %v1662
      %v1664 = vlaneseq
      %v1665 = vshrl.u32 %v1664, 7
      %v1666 = vsub.s32 %v1663, %v1665
      %v1667 = vrot.slane %v1653, %v1666
      %v1668 = vcombine.low %v1635, %v1651
      %v1669 = vcombine.high %v1635, %v1651
      %v1671 = vunpack.c.l.s4 1934713408
      %v1672 = vunpack.c.0.s8 %v1671
      %v1673 = vlaneseq
      %v1674 = vshrl.u32 %v1673, 7
      %v1675 = vsub.s32 %v1672, %v1674
      %v1676 = vrot.slane %v1668, %v1675
      %v1678 = vunpack.c.l.s4 1934713408
      %v1679 = vunpack.c.0.s8 %v1678
      %v1680 = vlaneseq
      %v1681 = vshrl.u32 %v1680, 7
      %v1682 = vsub.s32 %v1679, %v1681
      %v1683 = vrot.slane %v1669, %v1682
      %v1684 = vcombine.high %v1660, 0.0
      %v1685 = vcombine.high %v1667, 0.0
      %v1686 = vcombine.high %v1676, 0.0
      %v1687 = vcombine.high %v1683, 0.0
      %v1688 = vcombine.low %v1613, %v1617
      %v1689 = vcombine.high %v1613, %v1617
      %v1691 = vunpack.c.l.s4 1983009808
      %v1692 = vunpack.c.0.s8 %v1691
      %v1693 = vlaneseq
      %v1694 = vshrl.u32 %v1693, 7
      %v1695 = vsub.s32 %v1692, %v1694
      %v1696 = vrot.slane %v1688, %v1695
      %v1698 = vunpack.c.l.s4 1983009808
      %v1699 = vunpack.c.0.s8 %v1698
      %v1700 = vlaneseq
      %v1701 = vshrl.u32 %v1700, 7
      %v1702 = vsub.s32 %v1699, %v1701
      %v1703 = vrot.slane %v1689, %v1702
      %v1704 = vcombine.low %v1615, %v1619
      %v1705 = vcombine.high %v1615, %v1619
      %v1707 = vunpack.c.l.s4 1983009808
      %v1708 = vunpack.c.0.s8 %v1707
      %v1709 = vlaneseq
      %v1710 = vshrl.u32 %v1709, 7
      %v1711 = vsub.s32 %v1708, %v1710
      %v1712 = vrot.slane %v1704, %v1711
      %v1714 = vunpack.c.l.s4 1983009808
      %v1715 = vunpack.c.0.s8 %v1714
      %v1716 = vlaneseq
      %v1717 = vshrl.u32 %v1716, 7
      %v1718 = vsub.s32 %v1715, %v1717
      %v1719 = vrot.slane %v1705, %v1718
      %v1720 = vcombine.low %v1696, %v1712
      %v1721 = vcombine.high %v1696, %v1712
      %v1723 = vunpack.c.l.s4 1934713408
      %v1724 = vunpack.c.0.s8 %v1723
      %v1725 = vlaneseq
      %v1726 = vshrl.u32 %v1725, 7
      %v1727 = vsub.s32 %v1724, %v1726
      %v1728 = vrot.slane %v1720, %v1727
      %v1730 = vunpack.c.l.s4 1934713408
      %v1731 = vunpack.c.0.s8 %v1730
      %v1732 = vlaneseq
      %v1733 = vshrl.u32 %v1732, 7
      %v1734 = vsub.s32 %v1731, %v1733
      %v1735 = vrot.slane %v1721, %v1734
      %v1736 = vcombine.low %v1703, %v1719
      %v1737 = vcombine.high %v1703, %v1719
      %v1739 = vunpack.c.l.s4 1934713408
      %v1740 = vunpack.c.0.s8 %v1739
      %v1741 = vlaneseq
      %v1742 = vshrl.u32 %v1741, 7
      %v1743 = vsub.s32 %v1740, %v1742
      %v1744 = vrot.slane %v1736, %v1743
      %v1746 = vunpack.c.l.s4 1934713408
      %v1747 = vunpack.c.0.s8 %v1746
      %v1748 = vlaneseq
      %v1749 = vshrl.u32 %v1748, 7
      %v1750 = vsub.s32 %v1747, %v1749
      %v1751 = vrot.slane %v1737, %v1750
      %v1752 = vcombine.high %v1728, 0.0
      %v1753 = vcombine.high %v1735, 0.0
      %v1754 = vcombine.high %v1744, 0.0
      %v1755 = vcombine.high %v1751, 0.0
      %1757 = vrot.lane.b32.xlu0 %v1684, 16
      %v1758 = vpop.permute.xlu0 %1757
      %1761 = vrot.lane.b32.xlu0 %v1667, 32
      %v1762 = vpop.permute.xlu0 %1761
      %1765 = vrot.lane.b32.xlu0 %v1685, 48
      %v1766 = vpop.permute.xlu0 %1765
      %1769 = vrot.lane.b32.xlu0 %v1676, 64
      %v1770 = vpop.permute.xlu0 %1769
      %1773 = vrot.lane.b32.xlu0 %v1686, 80
      %v1774 = vpop.permute.xlu0 %1773
      %1777 = vrot.lane.b32.xlu0 %v1683, 96
      %v1778 = vpop.permute.xlu0 %1777
      %1781 = vrot.lane.b32.xlu0 %v1687, 112
      %v1782 = vpop.permute.xlu0 %1781
      %1785 = vrot.lane.b32.xlu0 %v1752, 16
      %v1786 = vpop.permute.xlu0 %1785
      %1789 = vrot.lane.b32.xlu0 %v1735, 32
      %v1790 = vpop.permute.xlu0 %1789
      %1793 = vrot.lane.b32.xlu0 %v1753, 48
      %v1794 = vpop.permute.xlu0 %1793
      %1797 = vrot.lane.b32.xlu0 %v1744, 64
      %v1798 = vpop.permute.xlu0 %1797
      %1801 = vrot.lane.b32.xlu0 %v1754, 80
      %v1802 = vpop.permute.xlu0 %1801
      %1805 = vrot.lane.b32.xlu0 %v1751, 96
      %v1806 = vpop.permute.xlu0 %1805
      %1809 = vrot.lane.b32.xlu0 %v1755, 112
      %v1810 = vpop.permute.xlu0 %1809
      %v1812 = vsel %vm437, %v1660, %v1758
      %v1813 = vsel %vm439, %v1812, %v1762
      %v1814 = vsel %vm441, %v1813, %v1766
      %v1815 = vsel %vm443, %v1814, %v1770
      %v1816 = vsel %vm445, %v1815, %v1774
      %v1817 = vsel %vm447, %v1816, %v1778
      %v1818 = vsel %vm449, %v1817, %v1782
      %v1819 = vsel %vm437, %v1728, %v1786
      %v1820 = vsel %vm439, %v1819, %v1790
      %v1821 = vsel %vm441, %v1820, %v1794
      %v1822 = vsel %vm443, %v1821, %v1798
      %v1823 = vsel %vm445, %v1822, %v1802
      %v1824 = vsel %vm447, %v1823, %v1806
      %v1825 = vsel %vm449, %v1824, %v1810
      %1834 = vrot.lane.b32.xlu0 %v1612, 127
      %v1835 = vpop.permute.xlu0 %1834
      %1836 = vrot.lane.b32.xlu0 %v1613, 127
      %v1837 = vpop.permute.xlu0 %1836
      %1838 = vrot.lane.b32.xlu0 %v1614, 127
      %v1839 = vpop.permute.xlu0 %1838
      %1840 = vrot.lane.b32.xlu0 %v1615, 127
      %v1841 = vpop.permute.xlu0 %1840
      %1842 = vrot.lane.b32.xlu0 %v1616, 127
      %v1843 = vpop.permute.xlu0 %1842
      %1844 = vrot.lane.b32.xlu0 %v1617, 127
      %v1845 = vpop.permute.xlu0 %1844
      %1846 = vrot.lane.b32.xlu0 %v1618, 127
      %v1847 = vpop.permute.xlu0 %1846
      %1848 = vrot.lane.b32.xlu0 %v1619, 127
      %v1849 = vpop.permute.xlu0 %1848
      %v1858 = vcombine.low %v1835, %v1843
      %v1859 = vcombine.high %v1835, %v1843
      %v1861 = vunpack.c.l.s4 1983009808
      %v1862 = vunpack.c.0.s8 %v1861
      %v1863 = vlaneseq
      %v1864 = vshrl.u32 %v1863, 7
      %v1865 = vsub.s32 %v1862, %v1864
      %v1866 = vrot.slane %v1858, %v1865
      %v1868 = vunpack.c.l.s4 1983009808
      %v1869 = vunpack.c.0.s8 %v1868
      %v1870 = vlaneseq
      %v1871 = vshrl.u32 %v1870, 7
      %v1872 = vsub.s32 %v1869, %v1871
      %v1873 = vrot.slane %v1859, %v1872
      %v1874 = vcombine.low %v1839, %v1847
      %v1875 = vcombine.high %v1839, %v1847
      %v1877 = vunpack.c.l.s4 1983009808
      %v1878 = vunpack.c.0.s8 %v1877
      %v1879 = vlaneseq
      %v1880 = vshrl.u32 %v1879, 7
      %v1881 = vsub.s32 %v1878, %v1880
      %v1882 = vrot.slane %v1874, %v1881
      %v1884 = vunpack.c.l.s4 1983009808
      %v1885 = vunpack.c.0.s8 %v1884
      %v1886 = vlaneseq
      %v1887 = vshrl.u32 %v1886, 7
      %v1888 = vsub.s32 %v1885, %v1887
      %v1889 = vrot.slane %v1875, %v1888
      %v1890 = vcombine.low %v1866, %v1882
      %v1891 = vcombine.high %v1866, %v1882
      %v1893 = vunpack.c.l.s4 1934713408
      %v1894 = vunpack.c.0.s8 %v1893
      %v1895 = vlaneseq
      %v1896 = vshrl.u32 %v1895, 7
      %v1897 = vsub.s32 %v1894, %v1896
      %v1898 = vrot.slane %v1890, %v1897
      %v1900 = vunpack.c.l.s4 1934713408
      %v1901 = vunpack.c.0.s8 %v1900
      %v1902 = vlaneseq
      %v1903 = vshrl.u32 %v1902, 7
      %v1904 = vsub.s32 %v1901, %v1903
      %v1905 = vrot.slane %v1891, %v1904
      %v1906 = vcombine.low %v1873, %v1889
      %v1907 = vcombine.high %v1873, %v1889
      %v1909 = vunpack.c.l.s4 1934713408
      %v1910 = vunpack.c.0.s8 %v1909
      %v1911 = vlaneseq
      %v1912 = vshrl.u32 %v1911, 7
      %v1913 = vsub.s32 %v1910, %v1912
      %v1914 = vrot.slane %v1906, %v1913
      %v1916 = vunpack.c.l.s4 1934713408
      %v1917 = vunpack.c.0.s8 %v1916
      %v1918 = vlaneseq
      %v1919 = vshrl.u32 %v1918, 7
      %v1920 = vsub.s32 %v1917, %v1919
      %v1921 = vrot.slane %v1907, %v1920
      %v1922 = vcombine.high %v1898, 0.0
      %v1923 = vcombine.high %v1905, 0.0
      %v1924 = vcombine.high %v1914, 0.0
      %v1925 = vcombine.high %v1921, 0.0
      %v1926 = vcombine.low %v1837, %v1845
      %v1927 = vcombine.high %v1837, %v1845
      %v1929 = vunpack.c.l.s4 1983009808
      %v1930 = vunpack.c.0.s8 %v1929
      %v1931 = vlaneseq
      %v1932 = vshrl.u32 %v1931, 7
      %v1933 = vsub.s32 %v1930, %v1932
      %v1934 = vrot.slane %v1926, %v1933
      %v1936 = vunpack.c.l.s4 1983009808
      %v1937 = vunpack.c.0.s8 %v1936
      %v1938 = vlaneseq
      %v1939 = vshrl.u32 %v1938, 7
      %v1940 = vsub.s32 %v1937, %v1939
      %v1941 = vrot.slane %v1927, %v1940
      %v1942 = vcombine.low %v1841, %v1849
      %v1943 = vcombine.high %v1841, %v1849
      %v1945 = vunpack.c.l.s4 1983009808
      %v1946 = vunpack.c.0.s8 %v1945
      %v1947 = vlaneseq
      %v1948 = vshrl.u32 %v1947, 7
      %v1949 = vsub.s32 %v1946, %v1948
      %v1950 = vrot.slane %v1942, %v1949
      %v1952 = vunpack.c.l.s4 1983009808
      %v1953 = vunpack.c.0.s8 %v1952
      %v1954 = vlaneseq
      %v1955 = vshrl.u32 %v1954, 7
      %v1956 = vsub.s32 %v1953, %v1955
      %v1957 = vrot.slane %v1943, %v1956
      %v1958 = vcombine.low %v1934, %v1950
      %v1959 = vcombine.high %v1934, %v1950
      %v1961 = vunpack.c.l.s4 1934713408
      %v1962 = vunpack.c.0.s8 %v1961
      %v1963 = vlaneseq
      %v1964 = vshrl.u32 %v1963, 7
      %v1965 = vsub.s32 %v1962, %v1964
      %v1966 = vrot.slane %v1958, %v1965
      %v1968 = vunpack.c.l.s4 1934713408
      %v1969 = vunpack.c.0.s8 %v1968
      %v1970 = vlaneseq
      %v1971 = vshrl.u32 %v1970, 7
      %v1972 = vsub.s32 %v1969, %v1971
      %v1973 = vrot.slane %v1959, %v1972
      %v1974 = vcombine.low %v1941, %v1957
      %v1975 = vcombine.high %v1941, %v1957
      %v1977 = vunpack.c.l.s4 1934713408
      %v1978 = vunpack.c.0.s8 %v1977
      %v1979 = vlaneseq
      %v1980 = vshrl.u32 %v1979, 7
      %v1981 = vsub.s32 %v1978, %v1980
      %v1982 = vrot.slane %v1974, %v1981
      %v1984 = vunpack.c.l.s4 1934713408
      %v1985 = vunpack.c.0.s8 %v1984
      %v1986 = vlaneseq
      %v1987 = vshrl.u32 %v1986, 7
      %v1988 = vsub.s32 %v1985, %v1987
      %v1989 = vrot.slane %v1975, %v1988
      %v1990 = vcombine.high %v1966, 0.0
      %v1991 = vcombine.high %v1973, 0.0
      %v1992 = vcombine.high %v1982, 0.0
      %v1993 = vcombine.high %v1989, 0.0
      %1995 = vrot.lane.b32.xlu0 %v1922, 16
      %v1996 = vpop.permute.xlu0 %1995
      %1999 = vrot.lane.b32.xlu0 %v1905, 32
      %v2000 = vpop.permute.xlu0 %1999
      %2003 = vrot.lane.b32.xlu0 %v1923, 48
      %v2004 = vpop.permute.xlu0 %2003
      %2007 = vrot.lane.b32.xlu0 %v1914, 64
      %v2008 = vpop.permute.xlu0 %2007
      %2011 = vrot.lane.b32.xlu0 %v1924, 80
      %v2012 = vpop.permute.xlu0 %2011
      %2015 = vrot.lane.b32.xlu0 %v1921, 96
      %v2016 = vpop.permute.xlu0 %2015
      %2019 = vrot.lane.b32.xlu0 %v1925, 112
      %v2020 = vpop.permute.xlu0 %2019
      %2023 = vrot.lane.b32.xlu0 %v1990, 16
      %v2024 = vpop.permute.xlu0 %2023
      %2027 = vrot.lane.b32.xlu0 %v1973, 32
      %v2028 = vpop.permute.xlu0 %2027
      %2031 = vrot.lane.b32.xlu0 %v1991, 48
      %v2032 = vpop.permute.xlu0 %2031
      %2035 = vrot.lane.b32.xlu0 %v1982, 64
      %v2036 = vpop.permute.xlu0 %2035
      %2039 = vrot.lane.b32.xlu0 %v1992, 80
      %v2040 = vpop.permute.xlu0 %2039
      %2043 = vrot.lane.b32.xlu0 %v1989, 96
      %v2044 = vpop.permute.xlu0 %2043
      %2047 = vrot.lane.b32.xlu0 %v1993, 112
      %v2048 = vpop.permute.xlu0 %2047
      %v2050 = vsel %vm437, %v1898, %v1996
      %v2051 = vsel %vm439, %v2050, %v2000
      %v2052 = vsel %vm441, %v2051, %v2004
      %v2053 = vsel %vm443, %v2052, %v2008
      %v2054 = vsel %vm445, %v2053, %v2012
      %v2055 = vsel %vm447, %v2054, %v2016
      %v2056 = vsel %vm449, %v2055, %v2020
      %v2057 = vsel %vm437, %v1966, %v2024
      %v2058 = vsel %vm439, %v2057, %v2028
      %v2059 = vsel %vm441, %v2058, %v2032
      %v2060 = vsel %vm443, %v2059, %v2036
      %v2061 = vsel %vm445, %v2060, %v2040
      %v2062 = vsel %vm447, %v2061, %v2044
      %v2063 = vsel %vm449, %v2062, %v2048
      %2064 = vrot.lane.b32.xlu0 %v1612, 126
      %v2065 = vpop.permute.xlu0 %2064
      %2066 = vrot.lane.b32.xlu0 %v1613, 126
      %v2067 = vpop.permute.xlu0 %2066
      %2068 = vrot.lane.b32.xlu0 %v1614, 126
      %v2069 = vpop.permute.xlu0 %2068
      %2070 = vrot.lane.b32.xlu0 %v1615, 126
      %v2071 = vpop.permute.xlu0 %2070
      %2072 = vrot.lane.b32.xlu0 %v1616, 126
      %v2073 = vpop.permute.xlu0 %2072
      %2074 = vrot.lane.b32.xlu0 %v1617, 126
      %v2075 = vpop.permute.xlu0 %2074
      %2076 = vrot.lane.b32.xlu0 %v1618, 126
      %v2077 = vpop.permute.xlu0 %2076
      %2078 = vrot.lane.b32.xlu0 %v1619, 126
      %v2079 = vpop.permute.xlu0 %2078
      %v2088 = vcombine.low %v2065, %v2073
      %v2089 = vcombine.high %v2065, %v2073
      %v2091 = vunpack.c.l.s4 1983009808
      %v2092 = vunpack.c.0.s8 %v2091
      %v2093 = vlaneseq
      %v2094 = vshrl.u32 %v2093, 7
      %v2095 = vsub.s32 %v2092, %v2094
      %v2096 = vrot.slane %v2088, %v2095
      %v2098 = vunpack.c.l.s4 1983009808
      %v2099 = vunpack.c.0.s8 %v2098
      %v2100 = vlaneseq
      %v2101 = vshrl.u32 %v2100, 7
      %v2102 = vsub.s32 %v2099, %v2101
      %v2103 = vrot.slane %v2089, %v2102
      %v2104 = vcombine.low %v2069, %v2077
      %v2105 = vcombine.high %v2069, %v2077
      %v2107 = vunpack.c.l.s4 1983009808
      %v2108 = vunpack.c.0.s8 %v2107
      %v2109 = vlaneseq
      %v2110 = vshrl.u32 %v2109, 7
      %v2111 = vsub.s32 %v2108, %v2110
      %v2112 = vrot.slane %v2104, %v2111
      %v2114 = vunpack.c.l.s4 1983009808
      %v2115 = vunpack.c.0.s8 %v2114
      %v2116 = vlaneseq
      %v2117 = vshrl.u32 %v2116, 7
      %v2118 = vsub.s32 %v2115, %v2117
      %v2119 = vrot.slane %v2105, %v2118
      %v2120 = vcombine.low %v2096, %v2112
      %v2121 = vcombine.high %v2096, %v2112
      %v2123 = vunpack.c.l.s4 1934713408
      %v2124 = vunpack.c.0.s8 %v2123
      %v2125 = vlaneseq
      %v2126 = vshrl.u32 %v2125, 7
      %v2127 = vsub.s32 %v2124, %v2126
      %v2128 = vrot.slane %v2120, %v2127
      %v2130 = vunpack.c.l.s4 1934713408
      %v2131 = vunpack.c.0.s8 %v2130
      %v2132 = vlaneseq
      %v2133 = vshrl.u32 %v2132, 7
      %v2134 = vsub.s32 %v2131, %v2133
      %v2135 = vrot.slane %v2121, %v2134
      %v2136 = vcombine.low %v2103, %v2119
      %v2137 = vcombine.high %v2103, %v2119
      %v2139 = vunpack.c.l.s4 1934713408
      %v2140 = vunpack.c.0.s8 %v2139
      %v2141 = vlaneseq
      %v2142 = vshrl.u32 %v2141, 7
      %v2143 = vsub.s32 %v2140, %v2142
      %v2144 = vrot.slane %v2136, %v2143
      %v2146 = vunpack.c.l.s4 1934713408
      %v2147 = vunpack.c.0.s8 %v2146
      %v2148 = vlaneseq
      %v2149 = vshrl.u32 %v2148, 7
      %v2150 = vsub.s32 %v2147, %v2149
      %v2151 = vrot.slane %v2137, %v2150
      %v2152 = vcombine.high %v2128, 0.0
      %v2153 = vcombine.high %v2135, 0.0
      %v2154 = vcombine.high %v2144, 0.0
      %v2155 = vcombine.high %v2151, 0.0
      %v2156 = vcombine.low %v2067, %v2075
      %v2157 = vcombine.high %v2067, %v2075
      %v2159 = vunpack.c.l.s4 1983009808
      %v2160 = vunpack.c.0.s8 %v2159
      %v2161 = vlaneseq
      %v2162 = vshrl.u32 %v2161, 7
      %v2163 = vsub.s32 %v2160, %v2162
      %v2164 = vrot.slane %v2156, %v2163
      %v2166 = vunpack.c.l.s4 1983009808
      %v2167 = vunpack.c.0.s8 %v2166
      %v2168 = vlaneseq
      %v2169 = vshrl.u32 %v2168, 7
      %v2170 = vsub.s32 %v2167, %v2169
      %v2171 = vrot.slane %v2157, %v2170
      %v2172 = vcombine.low %v2071, %v2079
      %v2173 = vcombine.high %v2071, %v2079
      %v2175 = vunpack.c.l.s4 1983009808
      %v2176 = vunpack.c.0.s8 %v2175
      %v2177 = vlaneseq
      %v2178 = vshrl.u32 %v2177, 7
      %v2179 = vsub.s32 %v2176, %v2178
      %v2180 = vrot.slane %v2172, %v2179
      %v2182 = vunpack.c.l.s4 1983009808
      %v2183 = vunpack.c.0.s8 %v2182
      %v2184 = vlaneseq
      %v2185 = vshrl.u32 %v2184, 7
      %v2186 = vsub.s32 %v2183, %v2185
      %v2187 = vrot.slane %v2173, %v2186
      %v2188 = vcombine.low %v2164, %v2180
      %v2189 = vcombine.high %v2164, %v2180
      %v2191 = vunpack.c.l.s4 1934713408
      %v2192 = vunpack.c.0.s8 %v2191
      %v2193 = vlaneseq
      %v2194 = vshrl.u32 %v2193, 7
      %v2195 = vsub.s32 %v2192, %v2194
      %v2196 = vrot.slane %v2188, %v2195
      %v2198 = vunpack.c.l.s4 1934713408
      %v2199 = vunpack.c.0.s8 %v2198
      %v2200 = vlaneseq
      %v2201 = vshrl.u32 %v2200, 7
      %v2202 = vsub.s32 %v2199, %v2201
      %v2203 = vrot.slane %v2189, %v2202
      %v2204 = vcombine.low %v2171, %v2187
      %v2205 = vcombine.high %v2171, %v2187
      %v2207 = vunpack.c.l.s4 1934713408
      %v2208 = vunpack.c.0.s8 %v2207
      %v2209 = vlaneseq
      %v2210 = vshrl.u32 %v2209, 7
      %v2211 = vsub.s32 %v2208, %v2210
      %v2212 = vrot.slane %v2204, %v2211
      %v2214 = vunpack.c.l.s4 1934713408
      %v2215 = vunpack.c.0.s8 %v2214
      %v2216 = vlaneseq
      %v2217 = vshrl.u32 %v2216, 7
      %v2218 = vsub.s32 %v2215, %v2217
      %v2219 = vrot.slane %v2205, %v2218
      %v2220 = vcombine.high %v2196, 0.0
      %v2221 = vcombine.high %v2203, 0.0
      %v2222 = vcombine.high %v2212, 0.0
      %v2223 = vcombine.high %v2219, 0.0
      %2225 = vrot.lane.b32.xlu0 %v2152, 16
      %v2226 = vpop.permute.xlu0 %2225
      %2229 = vrot.lane.b32.xlu0 %v2135, 32
      %v2230 = vpop.permute.xlu0 %2229
      %2233 = vrot.lane.b32.xlu0 %v2153, 48
      %v2234 = vpop.permute.xlu0 %2233
      %2237 = vrot.lane.b32.xlu0 %v2144, 64
      %v2238 = vpop.permute.xlu0 %2237
      %2241 = vrot.lane.b32.xlu0 %v2154, 80
      %v2242 = vpop.permute.xlu0 %2241
      %2245 = vrot.lane.b32.xlu0 %v2151, 96
      %v2246 = vpop.permute.xlu0 %2245
      %2249 = vrot.lane.b32.xlu0 %v2155, 112
      %v2250 = vpop.permute.xlu0 %2249
      %2253 = vrot.lane.b32.xlu0 %v2220, 16
      %v2254 = vpop.permute.xlu0 %2253
      %2257 = vrot.lane.b32.xlu0 %v2203, 32
      %v2258 = vpop.permute.xlu0 %2257
      %2261 = vrot.lane.b32.xlu0 %v2221, 48
      %v2262 = vpop.permute.xlu0 %2261
      %2265 = vrot.lane.b32.xlu0 %v2212, 64
      %v2266 = vpop.permute.xlu0 %2265
      %2269 = vrot.lane.b32.xlu0 %v2222, 80
      %v2270 = vpop.permute.xlu0 %2269
      %2273 = vrot.lane.b32.xlu0 %v2219, 96
      %v2274 = vpop.permute.xlu0 %2273
      %2277 = vrot.lane.b32.xlu0 %v2223, 112
      %v2278 = vpop.permute.xlu0 %2277
      %v2280 = vsel %vm437, %v2128, %v2226
      %v2281 = vsel %vm439, %v2280, %v2230
      %v2282 = vsel %vm441, %v2281, %v2234
      %v2283 = vsel %vm443, %v2282, %v2238
      %v2284 = vsel %vm445, %v2283, %v2242
      %v2285 = vsel %vm447, %v2284, %v2246
      %v2286 = vsel %vm449, %v2285, %v2250
      %v2287 = vsel %vm437, %v2196, %v2254
      %v2288 = vsel %vm439, %v2287, %v2258
      %v2289 = vsel %vm441, %v2288, %v2262
      %v2290 = vsel %vm443, %v2289, %v2266
      %v2291 = vsel %vm445, %v2290, %v2270
      %v2292 = vsel %vm447, %v2291, %v2274
      %v2293 = vsel %vm449, %v2292, %v2278
      %v2296 = vrot.slane %v688, 4
      %v2297 = vrot.slane %v695, 4
      %v2302 = vrot.slane %v1134, 4
      %v2303 = vrot.slane %v1141, 4
      %v2308 = vrot.slane %v1602, 4
      %v2309 = vrot.slane %v1609, 4
      %v2314 = vrot.slane %v2056, 4
      %v2315 = vrot.slane %v2063, 4
      %vm2318 = vcmask 1043456
      %v2319 = vsel %vm2318, %v450, %v2296
      %v2320 = vsel %vm2318, %v457, %v2297
      %v2321 = vsel %vm2318, %v918, %v2302
      %v2322 = vsel %vm2318, %v925, %v2303
      %v2323 = vsel %vm2318, %v1372, %v2308
      %v2324 = vsel %vm2318, %v1379, %v2309
      %v2325 = vsel %vm2318, %v1818, %v2314
      %v2326 = vsel %vm2318, %v1825, %v2315
      %v2327 = vpack.c.bf16 %v2321, %v2319
      %v2328 = vpack.c.bf16 %v2322, %v2320
      %v2329 = vpack.c.bf16 %v2325, %v2323
      %v2330 = vpack.c.bf16 %v2326, %v2324
      %v2331 = vpack.c.bf16 %v2286, %v2286
      %v2332 = vpack.c.bf16 %v2293, %v2293
      %v2333 = vld [vmem:[%s1] sm:$0xf]
      %v2334 = vunpack.c.l.bf16 %v2333
      %2336 = vset.pattern.permute.xlu0 36
      %2337 = vperm.xlu0 %2336, %v2334
      %v2338 = vpop.permute.xlu0 %2337
      %vm2340 = vcmask 293888
      %v2342 = vsel %vm2340, %v2333, 0
      %vm2344 = vcmask 1041408
      %v2346 = vsel %vm2344, %v2331, 0
      %v2349 = vsel %vm2344, %v2332, 0
      %2351 = vmatprep.subr.bf16.mxu0 %v2328
      %2352 = vmatpush1.bf16.msra.mxu0 %v2327
      %2353 = vmatprep.subr.bf16.mxu0 %v2330
      %2354 = vmatpush1.bf16.msra.mxu0 %v2329
      %2355 = vmatprep.subr.bf16.mxu0 %v2349
      %2356 = vmatpush1.bf16.msra.mxu0 %v2346
      %2357 = vmatprep.subr.bf16.mxu0 0
      %2358 = vmatpush1.bf16.msra.mxu0 0
      %2359 = vmatprep.subr.bf16.mxu0 0
      %2360 = vmatpush1.bf16.msra.mxu0 0
      %2361 = vmatprep.subr.bf16.mxu0 0
      %2362 = vmatpush1.bf16.msra.mxu0 0
      %2363 = vmatprep.subr.bf16.mxu0 0
      %2364 = vmatpush1.bf16.msra.mxu0 0
      %2365 = vmatprep.subr.bf16.mxu0 0
      %2366 = vmatpush1.bf16.msra.mxu0 0
      %2367 = vmatprep.subr.bf16.mxu0 0
      %2368 = vmatpush1.bf16.msra.mxu0 0
      %2369 = vmatprep.subr.bf16.mxu0 0
      %2370 = vmatpush1.bf16.msra.mxu0 0
      %2371 = vmatprep.subr.bf16.mxu0 0
      %2372 = vmatpush1.bf16.msra.mxu0 0
      %2373 = vmatprep.subr.bf16.mxu0 0
      %2374 = vmatpush1.bf16.msra.mxu0 0
      %2375 = vmatprep.subr.bf16.mxu0 0
      %2376 = vmatpush1.bf16.msra.mxu0 0
      %2377 = vmatprep.subr.bf16.mxu0 0
      %2378 = vmatpush1.bf16.msra.mxu0 0
      %2379 = vmatprep.subr.bf16.mxu0 0
      %2380 = vmatpush1.bf16.msra.mxu0 0
      %2381 = vmatprep.subr.bf16.mxu0 0
      %2382 = vmatpush1.bf16.msra.mxu0 0
      %2383 = vmatprep.mubr.bf16.mxu0 0
      %2384 = vmatmul.mubr.bf16.gmra.mrb[0].mxu0 %v2342
      %v2385 = vpop.f32.mrb[0].mxu0
      %v2386 = vadd.f32 %v2338, %v2385
      %v2387 = vpop.f32.mrb[0].mxu0
      %v2388 = vadd.f32 %v2338, %v2387
      %v2389 = vpop.f32.mrb[0].mxu0
      %v2390 = vpop.f32.mrb[0].mxu0
      %2391 = vdwg.mxu0
      %2392 = vst [vmem:[%s165] sm:$0xff] %v2386
      %2393 = vst [vmem:[%s165 + $0x8] sm:$0xff] %v2388
      %s2394 = smul.u32 2, %s18
      %p2395 = scmp.lt.s32.totalorder %s17, 1
      %s2396 = scalar_select %p2395, %s17, 1
      %p2397 = scmp.lt.s32.totalorder %s2394, 1
      %s2398 = scalar_select %p2397, %s2394, 1
      %s2399 = smul.addr %s2396, 2
      %s2400 = sadd.s32 %s2398, %s2399
      %s2401 = smul.addr %s2400, 8
      %s2402 = scalar_lea.vmem %s2, %s2401
      // Predicated region
      $region33: #{bayesian_conv2d_forward.3} parent=27 // pred_check
        %p2403 = pneg %p92
      $region34: #{bayesian_conv2d_forward.3} parent=27 // pred_check_branch
        %2405 = sbr.rel (%p2403) target = $region36
      $region35: #{bayesian_conv2d_forward.3} parent=27 // pred_region
        %s2406 = smul.u32 2, %s18
      $region36: #{bayesian_conv2d_forward.3} parent=27 // pred_fallthru
        _
    $region28: #{bayesian_conv2d_forward.3} parent=5 // pred_fallthru
      _
    %p2407 = scmp.le.s32.totalorder 2, %s8
    // Predicated region
    $region37: #{bayesian_conv2d_forward.3} parent=5 // pred_check
      %p2408 = pneg %p2407
    $region38: #{bayesian_conv2d_forward.3} parent=5 // pred_check_branch
      %2410 = sbr.rel (%p2408) target = $region40
    $region39: #{bayesian_conv2d_forward.3} parent=5 // pred_region
      %s2411 = ssub.s32 %s8, 2
      // Predicated region
      $region41: #{bayesian_conv2d_forward.3} parent=39 // pred_check
        %p2412 = pneg %p98
      $region42: #{bayesian_conv2d_forward.3} parent=39 // pred_check_branch
        %2414 = sbr.rel (%p2412) target = $region44
      $region43: #{bayesian_conv2d_forward.3} parent=39 // pred_region
        %s2415 = smul.u32 2, %s20
        %p2416 = scmp.lt.s32.totalorder %s19, 1
        %s2417 = scalar_select %p2416, %s19, 1
        %p2418 = scmp.lt.s32.totalorder %s2415, 1
        %s2419 = scalar_select %p2418, %s2415, 1
        %s2420 = smul.addr %s2417, 2
        %s2421 = sadd.s32 %s2419, %s2420
        %s2422 = smul.addr %s2421, 8
        %s2423 = scalar_lea.vmem %s2, %s2422
      $region44: #{bayesian_conv2d_forward.3} parent=39 // pred_fallthru
        _
    $region40: #{bayesian_conv2d_forward.3} parent=5 // pred_fallthru
      _
  $region6: #{bayesian_conv2d_forward.3} parent=0 // loop_footer
    %s12 = sadd.s32 1, %s8
  $region7: #{bayesian_conv2d_forward.3} parent=0 // loop_footer_branch
    %7 = sbr.rel target = $region3
  $region8: #{bayesian_conv2d_forward.3} parent=0 // loop_exit
    _

</llo_original>
